<compile_context>
chip_gen: v5e
topology: v5e:2x2
jax: 0.10.0
libtpu: 0.0.40
codegen_flags: <defaults>
</compile_context>

<pallas_src>
import functools

import jax
import jax.numpy as jnp
from jax.experimental import pallas as pl
from jax.experimental.pallas import tpu as pltpu


def _conv_kernel(x_ref, w_ref, b_ref, o_ref, *, W, KH, KW):
    """Whole batch in one grid step.

    x_ref: (N, Cin, H*W)          row-major flattened spatial (lane-dense)
    w_ref: (Cout, KH*KW*Cin)      weights, (ky, kx, c)-major flattening
    b_ref: (Cout, 1)              effective bias (time channel folded in)
    o_ref: (N, Cout, Hout, Wout)  NCHW output
    """
    N, Cin, HW = x_ref.shape
    _, _, Hout, Wout = o_ref.shape

    w_flat = w_ref[...]                               # (Cout, KH*KW*Cin)
    bias = b_ref[...]                                 # (Cout, 1)

    max_shift = (KH - 1) * W + (KW - 1)

    for n in range(N):                                # static unroll (tiny N)
        xn = x_ref[n]                                 # (Cin, HW)
        if max_shift:
            xp = jnp.concatenate(
                [xn, jnp.zeros((Cin, max_shift), xn.dtype)], axis=1)
        else:
            xp = xn

        # im2col via plain lane slices of the zero-extended row-major image:
        # tap (ky, kx) of output pixel p = oy*W + ox reads xp[:, p + ky*W + kx],
        # which is exactly x[:, oy+ky, ox+kx] for every valid output pixel
        # (out-of-range rows/cols only pollute positions we never store).
        taps = []
        for ky in range(KH):
            for kx in range(KW):
                s = ky * W + kx
                taps.append(xp[:, s:s + HW])          # (Cin, HW)
        patches = jnp.concatenate(taps, axis=0)       # (KH*KW*Cin, HW)

        # Single MXU matmul per image, f32 accumulation, lane-dense result.
        acc = jax.lax.dot_general(
            w_flat, patches,
            dimension_numbers=(((1,), (0,)), ((), ())),
            preferred_element_type=jnp.float32)       # (Cout, HW)
        acc = (acc + bias).astype(o_ref.dtype)

        # Extract the valid output columns (ox < Wout) straight into NCHW.
        for oy in range(Hout):                        # static unroll
            o_ref[n, :, oy, :] = acc[:, oy * W:oy * W + Wout]


@functools.partial(jax.jit, static_argnames=("stride", "padding"))
def time_concat_conv2d(t, x_nchw, w_oihw, bias, *, stride=1, padding=0):
    """Forward pass of TimeConcatConv2d (transpose=False).

    t      : scalar time
    x_nchw : (N, C, H, W) float32
    w_oihw : (C_out, C+1, KH, KW) float32
    bias   : (C_out,) float32
    returns: (N, C_out, Hout, Wout) float32
    """
    assert stride == 1, "only stride=1 implemented"
    # TODO(synk): ConvTranspose2d branch (transpose=True) not implemented.

    N, C, H, W = x_nchw.shape
    Cout, Cin1, KH, KW = w_oihw.shape
    assert Cin1 == C + 1

    if padding == 0:
        # Fast path: time channel is spatially constant -> fold into the bias
        # and convolve only the real C channels.
        x_used = x_nchw                                       # (N, C, H, W)
        w_used = w_oihw[:, 1:, :, :]                          # drop t-channel taps
        bias_eff = bias + t * jnp.sum(w_oihw[:, 0, :, :], axis=(1, 2))
    else:
        # General path: zero-padding makes the t-channel non-constant at the
        # border, so materialize it explicitly (matches torch exactly).
        t_chan = jnp.full((N, 1, H, W), t, x_nchw.dtype)
        x_used = jnp.concatenate([t_chan, x_nchw], axis=1)
        x_used = jnp.pad(
            x_used, ((0, 0), (0, 0), (padding, padding), (padding, padding)))
        w_used = w_oihw
        bias_eff = bias

    Cin_eff = x_used.shape[1]
    Hp, Wp = x_used.shape[2], x_used.shape[3]
    Hout, Wout = Hp - KH + 1, Wp - KW + 1

    # Tiny parameter-side prep only (no activation-sized HBM round trips).
    x_flat = x_used.reshape(N, Cin_eff, Hp * Wp)              # bitcast reshape
    w_flat = jnp.transpose(w_used, (0, 2, 3, 1)).reshape(Cout, KH * KW * Cin_eff)
    b2d = bias_eff.reshape(Cout, 1)

    kernel = functools.partial(_conv_kernel, W=Wp, KH=KH, KW=KW)

    return pl.pallas_call(
        kernel,
        out_shape=jax.ShapeDtypeStruct((N, Cout, Hout, Wout), x_nchw.dtype),
        grid_spec=pltpu.PrefetchScalarGridSpec(
            num_scalar_prefetch=0,
            grid=(1,),                                        # whole batch, one step
            in_specs=[
                pl.BlockSpec((N, Cin_eff, Hp * Wp), lambda i: (0, 0, 0)),
                pl.BlockSpec((Cout, KH * KW * Cin_eff), lambda i: (0, 0)),
                pl.BlockSpec((Cout, 1), lambda i: (0, 0)),
            ],
            out_specs=pl.BlockSpec((N, Cout, Hout, Wout),
                                   lambda i: (0, 0, 0, 0)),
        ),
        compiler_params=pltpu.CompilerParams(
            dimension_semantics=("arbitrary",)),
    )(x_flat, w_flat, b2d)


def _reference(t, x_nchw, w_oihw, bias, padding=0):
    """Pure-JAX reference (lax conv) for a correctness check."""
    N, C, H, W = x_nchw.shape
    t_channel = jnp.ones((N, 1, H, W), x_nchw.dtype) * t
    combined = jnp.concatenate([t_channel, x_nchw], axis=1)
    out = jax.lax.conv_general_dilated(
        combined, w_oihw, window_strides=(1, 1),
        padding=[(padding, padding), (padding, padding)],
        dimension_numbers=("NCHW", "OIHW", "NCHW"))
    return out + bias[None, :, None, None]


if __name__ == "__main__":
    # Small shapes consistent with the module: batch=2, c_in=4, 16x16 spatial,
    # c_out=8, kernel_size=3, stride=1, padding=0 (module defaults).
    N, C_IN, H, W = 2, 4, 16, 16
    C_OUT, K = 8, 3

    key = jax.random.PRNGKey(0)
    kx, kw, kb = jax.random.split(key, 3)

    x = jax.random.normal(kx, (N, C_IN, H, W), dtype=jnp.float32)
    fan_in = (C_IN + 1) * K * K
    bound = 1.0 / (fan_in ** 0.5)
    w = jax.random.uniform(kw, (C_OUT, C_IN + 1, K, K),
                           minval=-bound, maxval=bound, dtype=jnp.float32)
    b = jax.random.uniform(kb, (C_OUT,), minval=-bound, maxval=bound,
                           dtype=jnp.float32)
    t = jnp.float32(0.5)

    out = time_concat_conv2d(t, x, w, b, stride=1, padding=0)
    out = jax.block_until_ready(out)

    ref = jax.block_until_ready(_reference(t, x, w, b, padding=0))
    assert out.shape == (N, C_OUT, H - K + 1, W - K + 1), out.shape
    assert jnp.allclose(out, ref, atol=1e-4, rtol=1e-4), \
        float(jnp.max(jnp.abs(out - ref)))

    print("KERNEL_OK")
</pallas_src>

<mosaic_0001>
module attributes {stable_mosaic.version = 11 : i64} {
  func.func @_conv_kernel(%arg0: i32, %arg1: memref<2x4x256xf32, #tpu.memory_space<vmem>>, %arg2: memref<8x36xf32, #tpu.memory_space<vmem>>, %arg3: memref<8x1xf32, #tpu.memory_space<vmem>>, %arg4: memref<2x8x14x14xf32, #tpu.memory_space<vmem>>) attributes {dimension_semantics = [#tpu.dimension_semantics<arbitrary>], iteration_bounds = array<i64: 1>, scalar_prefetch = 0 : i64, scratch_operands = 0 : i64, tpu.core_type = #tpu.core_type<tc>, window_params = [{pipeline_mode = #tpu.pipeline_mode<synchronous>, transform_indices = @transform_0, window_bounds = array<i64: 2, 4, 256>}, {pipeline_mode = #tpu.pipeline_mode<synchronous>, transform_indices = @transform_1, window_bounds = array<i64: 8, 36>}, {pipeline_mode = #tpu.pipeline_mode<synchronous>, transform_indices = @transform_2, window_bounds = array<i64: 8, 1>}, {pipeline_mode = #tpu.pipeline_mode<synchronous>, transform_indices = @transform_3, window_bounds = array<i64: 2, 8, 14, 14>}]} {
    %c0 = arith.constant 0 : index
    %c0_0 = arith.constant 0 : index
    %0 = vector.load %arg2[%c0, %c0_0] : memref<8x36xf32, #tpu.memory_space<vmem>>, vector<8x36xf32>
    %c0_1 = arith.constant 0 : index
    %c0_2 = arith.constant 0 : index
    %1 = vector.load %arg3[%c0_1, %c0_2] : memref<8x1xf32, #tpu.memory_space<vmem>>, vector<8x1xf32>
    %c0_3 = arith.constant 0 : index
    %c0_4 = arith.constant 0 : index
    %c0_5 = arith.constant 0 : index
    %2 = vector.load %arg1[%c0_3, %c0_4, %c0_5] : memref<2x4x256xf32, #tpu.memory_space<vmem>>, vector<1x4x256xf32>
    %3 = vector.shape_cast %2 : vector<1x4x256xf32> to vector<4x256xf32>
    %cst = arith.constant 0.000000e+00 : f32
    %4 = vector.broadcast %cst : f32 to vector<4x34xf32>
    %5 = tpu.concatenate %3, %4 in 1 : vector<4x256xf32>, vector<4x34xf32> -> vector<4x290xf32>
    %6 = vector.extract_strided_slice %5 {offsets = [0, 0], sizes = [4, 256], strides = [1, 1]} : vector<4x290xf32> to vector<4x256xf32>
    %7 = vector.extract_strided_slice %5 {offsets = [0, 1], sizes = [4, 256], strides = [1, 1]} : vector<4x290xf32> to vector<4x256xf32>
    %8 = vector.extract_strided_slice %5 {offsets = [0, 2], sizes = [4, 256], strides = [1, 1]} : vector<4x290xf32> to vector<4x256xf32>
    %9 = vector.extract_strided_slice %5 {offsets = [0, 16], sizes = [4, 256], strides = [1, 1]} : vector<4x290xf32> to vector<4x256xf32>
    %10 = vector.extract_strided_slice %5 {offsets = [0, 17], sizes = [4, 256], strides = [1, 1]} : vector<4x290xf32> to vector<4x256xf32>
    %11 = vector.extract_strided_slice %5 {offsets = [0, 18], sizes = [4, 256], strides = [1, 1]} : vector<4x290xf32> to vector<4x256xf32>
    %12 = vector.extract_strided_slice %5 {offsets = [0, 32], sizes = [4, 256], strides = [1, 1]} : vector<4x290xf32> to vector<4x256xf32>
    %13 = vector.extract_strided_slice %5 {offsets = [0, 33], sizes = [4, 256], strides = [1, 1]} : vector<4x290xf32> to vector<4x256xf32>
    %14 = vector.extract_strided_slice %5 {offsets = [0, 34], sizes = [4, 256], strides = [1, 1]} : vector<4x290xf32> to vector<4x256xf32>
    %15 = tpu.concatenate %6, %7, %8, %9, %10, %11, %12, %13, %14 in 0 : vector<4x256xf32>, vector<4x256xf32>, vector<4x256xf32>, vector<4x256xf32>, vector<4x256xf32>, vector<4x256xf32>, vector<4x256xf32>, vector<4x256xf32>, vector<4x256xf32> -> vector<36x256xf32>
    %cst_6 = arith.constant dense<0.000000e+00> : vector<8x256xf32>
    %16 = tpu.matmul %0, %15, %cst_6 {dimension_numbers = #tpu.dot_dimension_numbers<[1], [0], [0], [1], [0, 0, 1, 1], [], []>} : vector<8x36xf32>, vector<36x256xf32>, vector<8x256xf32> -> vector<8x256xf32>
    %17 = vector.broadcast %1 : vector<8x1xf32> to vector<8x256xf32>
    %18 = arith.addf %16, %17 : vector<8x256xf32>
    %19 = vector.extract_strided_slice %18 {offsets = [0, 0], sizes = [8, 14], strides = [1, 1]} : vector<8x256xf32> to vector<8x14xf32>
    %c0_7 = arith.constant 0 : index
    %c0_8 = arith.constant 0 : index
    %c0_9 = arith.constant 0 : index
    %c0_10 = arith.constant 0 : index
    %20 = vector.load %arg4[%c0_7, %c0_8, %c0_9, %c0_10] : memref<2x8x14x14xf32, #tpu.memory_space<vmem>>, vector<1x8x1x14xf32>
    %21 = vector.shape_cast %20 : vector<1x8x1x14xf32> to vector<8x14xf32>
    %22 = vector.shape_cast %19 : vector<8x14xf32> to vector<1x8x1x14xf32>
    tpu.vector_store %arg4[%c0_7, %c0_8, %c0_9, %c0_10], %22 {strides = array<i32>} : memref<2x8x14x14xf32, #tpu.memory_space<vmem>>, vector<1x8x1x14xf32>,
    %23 = vector.extract_strided_slice %18 {offsets = [0, 16], sizes = [8, 14], strides = [1, 1]} : vector<8x256xf32> to vector<8x14xf32>
    %c0_11 = arith.constant 0 : index
    %c0_12 = arith.constant 0 : index
    %c1 = arith.constant 1 : index
    %c0_13 = arith.constant 0 : index
    %24 = vector.load %arg4[%c0_11, %c0_12, %c1, %c0_13] : memref<2x8x14x14xf32, #tpu.memory_space<vmem>>, vector<1x8x1x14xf32>
    %25 = vector.shape_cast %24 : vector<1x8x1x14xf32> to vector<8x14xf32>
    %26 = vector.shape_cast %23 : vector<8x14xf32> to vector<1x8x1x14xf32>
    tpu.vector_store %arg4[%c0_11, %c0_12, %c1, %c0_13], %26 {strides = array<i32>} : memref<2x8x14x14xf32, #tpu.memory_space<vmem>>, vector<1x8x1x14xf32>,
    %27 = vector.extract_strided_slice %18 {offsets = [0, 32], sizes = [8, 14], strides = [1, 1]} : vector<8x256xf32> to vector<8x14xf32>
    %c0_14 = arith.constant 0 : index
    %c0_15 = arith.constant 0 : index
    %c2 = arith.constant 2 : index
    %c0_16 = arith.constant 0 : index
    %28 = vector.load %arg4[%c0_14, %c0_15, %c2, %c0_16] : memref<2x8x14x14xf32, #tpu.memory_space<vmem>>, vector<1x8x1x14xf32>
    %29 = vector.shape_cast %28 : vector<1x8x1x14xf32> to vector<8x14xf32>
    %30 = vector.shape_cast %27 : vector<8x14xf32> to vector<1x8x1x14xf32>
    tpu.vector_store %arg4[%c0_14, %c0_15, %c2, %c0_16], %30 {strides = array<i32>} : memref<2x8x14x14xf32, #tpu.memory_space<vmem>>, vector<1x8x1x14xf32>,
    %31 = vector.extract_strided_slice %18 {offsets = [0, 48], sizes = [8, 14], strides = [1, 1]} : vector<8x256xf32> to vector<8x14xf32>
    %c0_17 = arith.constant 0 : index
    %c0_18 = arith.constant 0 : index
    %c3 = arith.constant 3 : index
    %c0_19 = arith.constant 0 : index
    %32 = vector.load %arg4[%c0_17, %c0_18, %c3, %c0_19] : memref<2x8x14x14xf32, #tpu.memory_space<vmem>>, vector<1x8x1x14xf32>
    %33 = vector.shape_cast %32 : vector<1x8x1x14xf32> to vector<8x14xf32>
    %34 = vector.shape_cast %31 : vector<8x14xf32> to vector<1x8x1x14xf32>
    tpu.vector_store %arg4[%c0_17, %c0_18, %c3, %c0_19], %34 {strides = array<i32>} : memref<2x8x14x14xf32, #tpu.memory_space<vmem>>, vector<1x8x1x14xf32>,
    %35 = vector.extract_strided_slice %18 {offsets = [0, 64], sizes = [8, 14], strides = [1, 1]} : vector<8x256xf32> to vector<8x14xf32>
    %c0_20 = arith.constant 0 : index
    %c0_21 = arith.constant 0 : index
    %c4 = arith.constant 4 : index
    %c0_22 = arith.constant 0 : index
    %36 = vector.load %arg4[%c0_20, %c0_21, %c4, %c0_22] : memref<2x8x14x14xf32, #tpu.memory_space<vmem>>, vector<1x8x1x14xf32>
    %37 = vector.shape_cast %36 : vector<1x8x1x14xf32> to vector<8x14xf32>
    %38 = vector.shape_cast %35 : vector<8x14xf32> to vector<1x8x1x14xf32>
    tpu.vector_store %arg4[%c0_20, %c0_21, %c4, %c0_22], %38 {strides = array<i32>} : memref<2x8x14x14xf32, #tpu.memory_space<vmem>>, vector<1x8x1x14xf32>,
    %39 = vector.extract_strided_slice %18 {offsets = [0, 80], sizes = [8, 14], strides = [1, 1]} : vector<8x256xf32> to vector<8x14xf32>
    %c0_23 = arith.constant 0 : index
    %c0_24 = arith.constant 0 : index
    %c5 = arith.constant 5 : index
    %c0_25 = arith.constant 0 : index
    %40 = vector.load %arg4[%c0_23, %c0_24, %c5, %c0_25] : memref<2x8x14x14xf32, #tpu.memory_space<vmem>>, vector<1x8x1x14xf32>
    %41 = vector.shape_cast %40 : vector<1x8x1x14xf32> to vector<8x14xf32>
    %42 = vector.shape_cast %39 : vector<8x14xf32> to vector<1x8x1x14xf32>
    tpu.vector_store %arg4[%c0_23, %c0_24, %c5, %c0_25], %42 {strides = array<i32>} : memref<2x8x14x14xf32, #tpu.memory_space<vmem>>, vector<1x8x1x14xf32>,
    %43 = vector.extract_strided_slice %18 {offsets = [0, 96], sizes = [8, 14], strides = [1, 1]} : vector<8x256xf32> to vector<8x14xf32>
    %c0_26 = arith.constant 0 : index
    %c0_27 = arith.constant 0 : index
    %c6 = arith.constant 6 : index
    %c0_28 = arith.constant 0 : index
    %44 = vector.load %arg4[%c0_26, %c0_27, %c6, %c0_28] : memref<2x8x14x14xf32, #tpu.memory_space<vmem>>, vector<1x8x1x14xf32>
    %45 = vector.shape_cast %44 : vector<1x8x1x14xf32> to vector<8x14xf32>
    %46 = vector.shape_cast %43 : vector<8x14xf32> to vector<1x8x1x14xf32>
    tpu.vector_store %arg4[%c0_26, %c0_27, %c6, %c0_28], %46 {strides = array<i32>} : memref<2x8x14x14xf32, #tpu.memory_space<vmem>>, vector<1x8x1x14xf32>,
    %47 = vector.extract_strided_slice %18 {offsets = [0, 112], sizes = [8, 14], strides = [1, 1]} : vector<8x256xf32> to vector<8x14xf32>
    %c0_29 = arith.constant 0 : index
    %c0_30 = arith.constant 0 : index
    %c7 = arith.constant 7 : index
    %c0_31 = arith.constant 0 : index
    %48 = vector.load %arg4[%c0_29, %c0_30, %c7, %c0_31] : memref<2x8x14x14xf32, #tpu.memory_space<vmem>>, vector<1x8x1x14xf32>
    %49 = vector.shape_cast %48 : vector<1x8x1x14xf32> to vector<8x14xf32>
    %50 = vector.shape_cast %47 : vector<8x14xf32> to vector<1x8x1x14xf32>
    tpu.vector_store %arg4[%c0_29, %c0_30, %c7, %c0_31], %50 {strides = array<i32>} : memref<2x8x14x14xf32, #tpu.memory_space<vmem>>, vector<1x8x1x14xf32>,
    %51 = vector.extract_strided_slice %18 {offsets = [0, 128], sizes = [8, 14], strides = [1, 1]} : vector<8x256xf32> to vector<8x14xf32>
    %c0_32 = arith.constant 0 : index
    %c0_33 = arith.constant 0 : index
    %c8 = arith.constant 8 : index
    %c0_34 = arith.constant 0 : index
    %52 = vector.load %arg4[%c0_32, %c0_33, %c8, %c0_34] : memref<2x8x14x14xf32, #tpu.memory_space<vmem>>, vector<1x8x1x14xf32>
    %53 = vector.shape_cast %52 : vector<1x8x1x14xf32> to vector<8x14xf32>
    %54 = vector.shape_cast %51 : vector<8x14xf32> to vector<1x8x1x14xf32>
    tpu.vector_store %arg4[%c0_32, %c0_33, %c8, %c0_34], %54 {strides = array<i32>} : memref<2x8x14x14xf32, #tpu.memory_space<vmem>>, vector<1x8x1x14xf32>,
    %55 = vector.extract_strided_slice %18 {offsets = [0, 144], sizes = [8, 14], strides = [1, 1]} : vector<8x256xf32> to vector<8x14xf32>
    %c0_35 = arith.constant 0 : index
    %c0_36 = arith.constant 0 : index
    %c9 = arith.constant 9 : index
    %c0_37 = arith.constant 0 : index
    %56 = vector.load %arg4[%c0_35, %c0_36, %c9, %c0_37] : memref<2x8x14x14xf32, #tpu.memory_space<vmem>>, vector<1x8x1x14xf32>
    %57 = vector.shape_cast %56 : vector<1x8x1x14xf32> to vector<8x14xf32>
    %58 = vector.shape_cast %55 : vector<8x14xf32> to vector<1x8x1x14xf32>
    tpu.vector_store %arg4[%c0_35, %c0_36, %c9, %c0_37], %58 {strides = array<i32>} : memref<2x8x14x14xf32, #tpu.memory_space<vmem>>, vector<1x8x1x14xf32>,
    %59 = vector.extract_strided_slice %18 {offsets = [0, 160], sizes = [8, 14], strides = [1, 1]} : vector<8x256xf32> to vector<8x14xf32>
    %c0_38 = arith.constant 0 : index
    %c0_39 = arith.constant 0 : index
    %c10 = arith.constant 10 : index
    %c0_40 = arith.constant 0 : index
    %60 = vector.load %arg4[%c0_38, %c0_39, %c10, %c0_40] : memref<2x8x14x14xf32, #tpu.memory_space<vmem>>, vector<1x8x1x14xf32>
    %61 = vector.shape_cast %60 : vector<1x8x1x14xf32> to vector<8x14xf32>
    %62 = vector.shape_cast %59 : vector<8x14xf32> to vector<1x8x1x14xf32>
    tpu.vector_store %arg4[%c0_38, %c0_39, %c10, %c0_40], %62 {strides = array<i32>} : memref<2x8x14x14xf32, #tpu.memory_space<vmem>>, vector<1x8x1x14xf32>,
    %63 = vector.extract_strided_slice %18 {offsets = [0, 176], sizes = [8, 14], strides = [1, 1]} : vector<8x256xf32> to vector<8x14xf32>
    %c0_41 = arith.constant 0 : index
    %c0_42 = arith.constant 0 : index
    %c11 = arith.constant 11 : index
    %c0_43 = arith.constant 0 : index
    %64 = vector.load %arg4[%c0_41, %c0_42, %c11, %c0_43] : memref<2x8x14x14xf32, #tpu.memory_space<vmem>>, vector<1x8x1x14xf32>
    %65 = vector.shape_cast %64 : vector<1x8x1x14xf32> to vector<8x14xf32>
    %66 = vector.shape_cast %63 : vector<8x14xf32> to vector<1x8x1x14xf32>
    tpu.vector_store %arg4[%c0_41, %c0_42, %c11, %c0_43], %66 {strides = array<i32>} : memref<2x8x14x14xf32, #tpu.memory_space<vmem>>, vector<1x8x1x14xf32>,
    %67 = vector.extract_strided_slice %18 {offsets = [0, 192], sizes = [8, 14], strides = [1, 1]} : vector<8x256xf32> to vector<8x14xf32>
    %c0_44 = arith.constant 0 : index
    %c0_45 = arith.constant 0 : index
    %c12 = arith.constant 12 : index
    %c0_46 = arith.constant 0 : index
    %68 = vector.load %arg4[%c0_44, %c0_45, %c12, %c0_46] : memref<2x8x14x14xf32, #tpu.memory_space<vmem>>, vector<1x8x1x14xf32>
    %69 = vector.shape_cast %68 : vector<1x8x1x14xf32> to vector<8x14xf32>
    %70 = vector.shape_cast %67 : vector<8x14xf32> to vector<1x8x1x14xf32>
    tpu.vector_store %arg4[%c0_44, %c0_45, %c12, %c0_46], %70 {strides = array<i32>} : memref<2x8x14x14xf32, #tpu.memory_space<vmem>>, vector<1x8x1x14xf32>,
    %71 = vector.extract_strided_slice %18 {offsets = [0, 208], sizes = [8, 14], strides = [1, 1]} : vector<8x256xf32> to vector<8x14xf32>
    %c0_47 = arith.constant 0 : index
    %c0_48 = arith.constant 0 : index
    %c13 = arith.constant 13 : index
    %c0_49 = arith.constant 0 : index
    %72 = vector.load %arg4[%c0_47, %c0_48, %c13, %c0_49] : memref<2x8x14x14xf32, #tpu.memory_space<vmem>>, vector<1x8x1x14xf32>
    %73 = vector.shape_cast %72 : vector<1x8x1x14xf32> to vector<8x14xf32>
    %74 = vector.shape_cast %71 : vector<8x14xf32> to vector<1x8x1x14xf32>
    tpu.vector_store %arg4[%c0_47, %c0_48, %c13, %c0_49], %74 {strides = array<i32>} : memref<2x8x14x14xf32, #tpu.memory_space<vmem>>, vector<1x8x1x14xf32>,
    %c1_50 = arith.constant 1 : index
    %c0_51 = arith.constant 0 : index
    %c0_52 = arith.constant 0 : index
    %75 = vector.load %arg1[%c1_50, %c0_51, %c0_52] : memref<2x4x256xf32, #tpu.memory_space<vmem>>, vector<1x4x256xf32>
    %76 = vector.shape_cast %75 : vector<1x4x256xf32> to vector<4x256xf32>
    %cst_53 = arith.constant 0.000000e+00 : f32
    %77 = vector.broadcast %cst_53 : f32 to vector<4x34xf32>
    %78 = tpu.concatenate %76, %77 in 1 : vector<4x256xf32>, vector<4x34xf32> -> vector<4x290xf32>
    %79 = vector.extract_strided_slice %78 {offsets = [0, 0], sizes = [4, 256], strides = [1, 1]} : vector<4x290xf32> to vector<4x256xf32>
    %80 = vector.extract_strided_slice %78 {offsets = [0, 1], sizes = [4, 256], strides = [1, 1]} : vector<4x290xf32> to vector<4x256xf32>
    %81 = vector.extract_strided_slice %78 {offsets = [0, 2], sizes = [4, 256], strides = [1, 1]} : vector<4x290xf32> to vector<4x256xf32>
    %82 = vector.extract_strided_slice %78 {offsets = [0, 16], sizes = [4, 256], strides = [1, 1]} : vector<4x290xf32> to vector<4x256xf32>
    %83 = vector.extract_strided_slice %78 {offsets = [0, 17], sizes = [4, 256], strides = [1, 1]} : vector<4x290xf32> to vector<4x256xf32>
    %84 = vector.extract_strided_slice %78 {offsets = [0, 18], sizes = [4, 256], strides = [1, 1]} : vector<4x290xf32> to vector<4x256xf32>
    %85 = vector.extract_strided_slice %78 {offsets = [0, 32], sizes = [4, 256], strides = [1, 1]} : vector<4x290xf32> to vector<4x256xf32>
    %86 = vector.extract_strided_slice %78 {offsets = [0, 33], sizes = [4, 256], strides = [1, 1]} : vector<4x290xf32> to vector<4x256xf32>
    %87 = vector.extract_strided_slice %78 {offsets = [0, 34], sizes = [4, 256], strides = [1, 1]} : vector<4x290xf32> to vector<4x256xf32>
    %88 = tpu.concatenate %79, %80, %81, %82, %83, %84, %85, %86, %87 in 0 : vector<4x256xf32>, vector<4x256xf32>, vector<4x256xf32>, vector<4x256xf32>, vector<4x256xf32>, vector<4x256xf32>, vector<4x256xf32>, vector<4x256xf32>, vector<4x256xf32> -> vector<36x256xf32>
    %cst_54 = arith.constant dense<0.000000e+00> : vector<8x256xf32>
    %89 = tpu.matmul %0, %88, %cst_54 {dimension_numbers = #tpu.dot_dimension_numbers<[1], [0], [0], [1], [0, 0, 1, 1], [], []>} : vector<8x36xf32>, vector<36x256xf32>, vector<8x256xf32> -> vector<8x256xf32>
    %90 = vector.broadcast %1 : vector<8x1xf32> to vector<8x256xf32>
    %91 = arith.addf %89, %90 : vector<8x256xf32>
    %92 = vector.extract_strided_slice %91 {offsets = [0, 0], sizes = [8, 14], strides = [1, 1]} : vector<8x256xf32> to vector<8x14xf32>
    %c1_55 = arith.constant 1 : index
    %c0_56 = arith.constant 0 : index
    %c0_57 = arith.constant 0 : index
    %c0_58 = arith.constant 0 : index
    %93 = vector.load %arg4[%c1_55, %c0_56, %c0_57, %c0_58] : memref<2x8x14x14xf32, #tpu.memory_space<vmem>>, vector<1x8x1x14xf32>
    %94 = vector.shape_cast %93 : vector<1x8x1x14xf32> to vector<8x14xf32>
    %95 = vector.shape_cast %92 : vector<8x14xf32> to vector<1x8x1x14xf32>
    tpu.vector_store %arg4[%c1_55, %c0_56, %c0_57, %c0_58], %95 {strides = array<i32>} : memref<2x8x14x14xf32, #tpu.memory_space<vmem>>, vector<1x8x1x14xf32>,
    %96 = vector.extract_strided_slice %91 {offsets = [0, 16], sizes = [8, 14], strides = [1, 1]} : vector<8x256xf32> to vector<8x14xf32>
    %c1_59 = arith.constant 1 : index
    %c0_60 = arith.constant 0 : index
    %c1_61 = arith.constant 1 : index
    %c0_62 = arith.constant 0 : index
    %97 = vector.load %arg4[%c1_59, %c0_60, %c1_61, %c0_62] : memref<2x8x14x14xf32, #tpu.memory_space<vmem>>, vector<1x8x1x14xf32>
    %98 = vector.shape_cast %97 : vector<1x8x1x14xf32> to vector<8x14xf32>
    %99 = vector.shape_cast %96 : vector<8x14xf32> to vector<1x8x1x14xf32>
    tpu.vector_store %arg4[%c1_59, %c0_60, %c1_61, %c0_62], %99 {strides = array<i32>} : memref<2x8x14x14xf32, #tpu.memory_space<vmem>>, vector<1x8x1x14xf32>,
    %100 = vector.extract_strided_slice %91 {offsets = [0, 32], sizes = [8, 14], strides = [1, 1]} : vector<8x256xf32> to vector<8x14xf32>
    %c1_63 = arith.constant 1 : index
    %c0_64 = arith.constant 0 : index
    %c2_65 = arith.constant 2 : index
    %c0_66 = arith.constant 0 : index
    %101 = vector.load %arg4[%c1_63, %c0_64, %c2_65, %c0_66] : memref<2x8x14x14xf32, #tpu.memory_space<vmem>>, vector<1x8x1x14xf32>
    %102 = vector.shape_cast %101 : vector<1x8x1x14xf32> to vector<8x14xf32>
    %103 = vector.shape_cast %100 : vector<8x14xf32> to vector<1x8x1x14xf32>
    tpu.vector_store %arg4[%c1_63, %c0_64, %c2_65, %c0_66], %103 {strides = array<i32>} : memref<2x8x14x14xf32, #tpu.memory_space<vmem>>, vector<1x8x1x14xf32>,
    %104 = vector.extract_strided_slice %91 {offsets = [0, 48], sizes = [8, 14], strides = [1, 1]} : vector<8x256xf32> to vector<8x14xf32>
    %c1_67 = arith.constant 1 : index
    %c0_68 = arith.constant 0 : index
    %c3_69 = arith.constant 3 : index
    %c0_70 = arith.constant 0 : index
    %105 = vector.load %arg4[%c1_67, %c0_68, %c3_69, %c0_70] : memref<2x8x14x14xf32, #tpu.memory_space<vmem>>, vector<1x8x1x14xf32>
    %106 = vector.shape_cast %105 : vector<1x8x1x14xf32> to vector<8x14xf32>
    %107 = vector.shape_cast %104 : vector<8x14xf32> to vector<1x8x1x14xf32>
    tpu.vector_store %arg4[%c1_67, %c0_68, %c3_69, %c0_70], %107 {strides = array<i32>} : memref<2x8x14x14xf32, #tpu.memory_space<vmem>>, vector<1x8x1x14xf32>,
    %108 = vector.extract_strided_slice %91 {offsets = [0, 64], sizes = [8, 14], strides = [1, 1]} : vector<8x256xf32> to vector<8x14xf32>
    %c1_71 = arith.constant 1 : index
    %c0_72 = arith.constant 0 : index
    %c4_73 = arith.constant 4 : index
    %c0_74 = arith.constant 0 : index
    %109 = vector.load %arg4[%c1_71, %c0_72, %c4_73, %c0_74] : memref<2x8x14x14xf32, #tpu.memory_space<vmem>>, vector<1x8x1x14xf32>
    %110 = vector.shape_cast %109 : vector<1x8x1x14xf32> to vector<8x14xf32>
    %111 = vector.shape_cast %108 : vector<8x14xf32> to vector<1x8x1x14xf32>
    tpu.vector_store %arg4[%c1_71, %c0_72, %c4_73, %c0_74], %111 {strides = array<i32>} : memref<2x8x14x14xf32, #tpu.memory_space<vmem>>, vector<1x8x1x14xf32>,
    %112 = vector.extract_strided_slice %91 {offsets = [0, 80], sizes = [8, 14], strides = [1, 1]} : vector<8x256xf32> to vector<8x14xf32>
    %c1_75 = arith.constant 1 : index
    %c0_76 = arith.constant 0 : index
    %c5_77 = arith.constant 5 : index
    %c0_78 = arith.constant 0 : index
    %113 = vector.load %arg4[%c1_75, %c0_76, %c5_77, %c0_78] : memref<2x8x14x14xf32, #tpu.memory_space<vmem>>, vector<1x8x1x14xf32>
    %114 = vector.shape_cast %113 : vector<1x8x1x14xf32> to vector<8x14xf32>
    %115 = vector.shape_cast %112 : vector<8x14xf32> to vector<1x8x1x14xf32>
    tpu.vector_store %arg4[%c1_75, %c0_76, %c5_77, %c0_78], %115 {strides = array<i32>} : memref<2x8x14x14xf32, #tpu.memory_space<vmem>>, vector<1x8x1x14xf32>,
    %116 = vector.extract_strided_slice %91 {offsets = [0, 96], sizes = [8, 14], strides = [1, 1]} : vector<8x256xf32> to vector<8x14xf32>
    %c1_79 = arith.constant 1 : index
    %c0_80 = arith.constant 0 : index
    %c6_81 = arith.constant 6 : index
    %c0_82 = arith.constant 0 : index
    %117 = vector.load %arg4[%c1_79, %c0_80, %c6_81, %c0_82] : memref<2x8x14x14xf32, #tpu.memory_space<vmem>>, vector<1x8x1x14xf32>
    %118 = vector.shape_cast %117 : vector<1x8x1x14xf32> to vector<8x14xf32>
    %119 = vector.shape_cast %116 : vector<8x14xf32> to vector<1x8x1x14xf32>
    tpu.vector_store %arg4[%c1_79, %c0_80, %c6_81, %c0_82], %119 {strides = array<i32>} : memref<2x8x14x14xf32, #tpu.memory_space<vmem>>, vector<1x8x1x14xf32>,
    %120 = vector.extract_strided_slice %91 {offsets = [0, 112], sizes = [8, 14], strides = [1, 1]} : vector<8x256xf32> to vector<8x14xf32>
    %c1_83 = arith.constant 1 : index
    %c0_84 = arith.constant 0 : index
    %c7_85 = arith.constant 7 : index
    %c0_86 = arith.constant 0 : index
    %121 = vector.load %arg4[%c1_83, %c0_84, %c7_85, %c0_86] : memref<2x8x14x14xf32, #tpu.memory_space<vmem>>, vector<1x8x1x14xf32>
    %122 = vector.shape_cast %121 : vector<1x8x1x14xf32> to vector<8x14xf32>
    %123 = vector.shape_cast %120 : vector<8x14xf32> to vector<1x8x1x14xf32>
    tpu.vector_store %arg4[%c1_83, %c0_84, %c7_85, %c0_86], %123 {strides = array<i32>} : memref<2x8x14x14xf32, #tpu.memory_space<vmem>>, vector<1x8x1x14xf32>,
    %124 = vector.extract_strided_slice %91 {offsets = [0, 128], sizes = [8, 14], strides = [1, 1]} : vector<8x256xf32> to vector<8x14xf32>
    %c1_87 = arith.constant 1 : index
    %c0_88 = arith.constant 0 : index
    %c8_89 = arith.constant 8 : index
    %c0_90 = arith.constant 0 : index
    %125 = vector.load %arg4[%c1_87, %c0_88, %c8_89, %c0_90] : memref<2x8x14x14xf32, #tpu.memory_space<vmem>>, vector<1x8x1x14xf32>
    %126 = vector.shape_cast %125 : vector<1x8x1x14xf32> to vector<8x14xf32>
    %127 = vector.shape_cast %124 : vector<8x14xf32> to vector<1x8x1x14xf32>
    tpu.vector_store %arg4[%c1_87, %c0_88, %c8_89, %c0_90], %127 {strides = array<i32>} : memref<2x8x14x14xf32, #tpu.memory_space<vmem>>, vector<1x8x1x14xf32>,
    %128 = vector.extract_strided_slice %91 {offsets = [0, 144], sizes = [8, 14], strides = [1, 1]} : vector<8x256xf32> to vector<8x14xf32>
    %c1_91 = arith.constant 1 : index
    %c0_92 = arith.constant 0 : index
    %c9_93 = arith.constant 9 : index
    %c0_94 = arith.constant 0 : index
    %129 = vector.load %arg4[%c1_91, %c0_92, %c9_93, %c0_94] : memref<2x8x14x14xf32, #tpu.memory_space<vmem>>, vector<1x8x1x14xf32>
    %130 = vector.shape_cast %129 : vector<1x8x1x14xf32> to vector<8x14xf32>
    %131 = vector.shape_cast %128 : vector<8x14xf32> to vector<1x8x1x14xf32>
    tpu.vector_store %arg4[%c1_91, %c0_92, %c9_93, %c0_94], %131 {strides = array<i32>} : memref<2x8x14x14xf32, #tpu.memory_space<vmem>>, vector<1x8x1x14xf32>,
    %132 = vector.extract_strided_slice %91 {offsets = [0, 160], sizes = [8, 14], strides = [1, 1]} : vector<8x256xf32> to vector<8x14xf32>
    %c1_95 = arith.constant 1 : index
    %c0_96 = arith.constant 0 : index
    %c10_97 = arith.constant 10 : index
    %c0_98 = arith.constant 0 : index
    %133 = vector.load %arg4[%c1_95, %c0_96, %c10_97, %c0_98] : memref<2x8x14x14xf32, #tpu.memory_space<vmem>>, vector<1x8x1x14xf32>
    %134 = vector.shape_cast %133 : vector<1x8x1x14xf32> to vector<8x14xf32>
    %135 = vector.shape_cast %132 : vector<8x14xf32> to vector<1x8x1x14xf32>
    tpu.vector_store %arg4[%c1_95, %c0_96, %c10_97, %c0_98], %135 {strides = array<i32>} : memref<2x8x14x14xf32, #tpu.memory_space<vmem>>, vector<1x8x1x14xf32>,
    %136 = vector.extract_strided_slice %91 {offsets = [0, 176], sizes = [8, 14], strides = [1, 1]} : vector<8x256xf32> to vector<8x14xf32>
    %c1_99 = arith.constant 1 : index
    %c0_100 = arith.constant 0 : index
    %c11_101 = arith.constant 11 : index
    %c0_102 = arith.constant 0 : index
    %137 = vector.load %arg4[%c1_99, %c0_100, %c11_101, %c0_102] : memref<2x8x14x14xf32, #tpu.memory_space<vmem>>, vector<1x8x1x14xf32>
    %138 = vector.shape_cast %137 : vector<1x8x1x14xf32> to vector<8x14xf32>
    %139 = vector.shape_cast %136 : vector<8x14xf32> to vector<1x8x1x14xf32>
    tpu.vector_store %arg4[%c1_99, %c0_100, %c11_101, %c0_102], %139 {strides = array<i32>} : memref<2x8x14x14xf32, #tpu.memory_space<vmem>>, vector<1x8x1x14xf32>,
    %140 = vector.extract_strided_slice %91 {offsets = [0, 192], sizes = [8, 14], strides = [1, 1]} : vector<8x256xf32> to vector<8x14xf32>
    %c1_103 = arith.constant 1 : index
    %c0_104 = arith.constant 0 : index
    %c12_105 = arith.constant 12 : index
    %c0_106 = arith.constant 0 : index
    %141 = vector.load %arg4[%c1_103, %c0_104, %c12_105, %c0_106] : memref<2x8x14x14xf32, #tpu.memory_space<vmem>>, vector<1x8x1x14xf32>
    %142 = vector.shape_cast %141 : vector<1x8x1x14xf32> to vector<8x14xf32>
    %143 = vector.shape_cast %140 : vector<8x14xf32> to vector<1x8x1x14xf32>
    tpu.vector_store %arg4[%c1_103, %c0_104, %c12_105, %c0_106], %143 {strides = array<i32>} : memref<2x8x14x14xf32, #tpu.memory_space<vmem>>, vector<1x8x1x14xf32>,
    %144 = vector.extract_strided_slice %91 {offsets = [0, 208], sizes = [8, 14], strides = [1, 1]} : vector<8x256xf32> to vector<8x14xf32>
    %c1_107 = arith.constant 1 : index
    %c0_108 = arith.constant 0 : index
    %c13_109 = arith.constant 13 : index
    %c0_110 = arith.constant 0 : index
    %145 = vector.load %arg4[%c1_107, %c0_108, %c13_109, %c0_110] : memref<2x8x14x14xf32, #tpu.memory_space<vmem>>, vector<1x8x1x14xf32>
    %146 = vector.shape_cast %145 : vector<1x8x1x14xf32> to vector<8x14xf32>
    %147 = vector.shape_cast %144 : vector<8x14xf32> to vector<1x8x1x14xf32>
    tpu.vector_store %arg4[%c1_107, %c0_108, %c13_109, %c0_110], %147 {strides = array<i32>} : memref<2x8x14x14xf32, #tpu.memory_space<vmem>>, vector<1x8x1x14xf32>,
    return
  }
  func.func @transform_0(%arg0: i32) -> (i32, i32, i32) {
    %c0_i32 = arith.constant 0 : i32
    %c0_i32_0 = arith.constant 0 : i32
    %c0_i32_1 = arith.constant 0 : i32
    %c0_i32_2 = arith.constant 0 : i32
    return %c0_i32, %c0_i32_0, %c0_i32_1 : i32, i32, i32
  }
  func.func @transform_1(%arg0: i32) -> (i32, i32) {
    %c0_i32 = arith.constant 0 : i32
    %c0_i32_0 = arith.constant 0 : i32
    %c0_i32_1 = arith.constant 0 : i32
    return %c0_i32, %c0_i32_0 : i32, i32
  }
  func.func @transform_2(%arg0: i32) -> (i32, i32) {
    %c0_i32 = arith.constant 0 : i32
    %c0_i32_0 = arith.constant 0 : i32
    %c0_i32_1 = arith.constant 0 : i32
    return %c0_i32, %c0_i32_0 : i32, i32
  }
  func.func @transform_3(%arg0: i32) -> (i32, i32, i32, i32) {
    %c0_i32 = arith.constant 0 : i32
    %c0_i32_0 = arith.constant 0 : i32
    %c0_i32_1 = arith.constant 0 : i32
    %c0_i32_2 = arith.constant 0 : i32
    %c0_i32_3 = arith.constant 0 : i32
    return %c0_i32, %c0_i32_0, %c0_i32_1, %c0_i32_2 : i32, i32, i32, i32
  }
}

</mosaic_0001>

<llo_original>
// kernel: time_concat_conv2d.1
$region0: #{time_concat_conv2d.1}
  #allocation0 [shape = 'u32[]', space=smem, size = 0x4, offset = 0x4, fixed_abs, tag = 'smem constant byte address 0x4 - core index']
  #allocation1 [shape = 'u32[72,128]{1,0:T(1,128)}', space=vmem, size = 0x9000, scoped, tag = 'internal scratch']
  %s0 = inlined_call_operand.vmem [shape: f32[2,4,256], index: 0, kind: input, shape index: {}]
  %s1 = inlined_call_operand.vmem [shape: f32[8,36], index: 1, kind: input, shape index: {}]
  %s2 = inlined_call_operand.vmem [shape: f32[8,1], index: 2, kind: input, shape index: {}]
  %s3 = inlined_call_operand.vmem [shape: f32[2,8,14,14], index: 3, kind: output, shape index: {}]
  %s4 = sld [smem:[#allocation0]]
  $region22: #{time_concat_conv2d.1} parent=0
    _
  %s6 = ssub.s32 1, %s4
  %s7 = scalar_select 0, %s6, %s4
  // Predicated region
  $region2: #{time_concat_conv2d.1} parent=0 // pred_check
    _
  $region3: #{time_concat_conv2d.1} parent=0 // pred_check_branch
    %9 = sbr.rel (0) target = $region5
  $region4: #{time_concat_conv2d.1} parent=0 // pred_region
    _
  $region5: #{time_concat_conv2d.1} parent=0 // pred_fallthru
    _
  // Predicated region
  $region6: #{time_concat_conv2d.1} parent=0 // pred_check
    _
  $region7: #{time_concat_conv2d.1} parent=0 // pred_check_branch
    %11 = sbr.rel (0) target = $region9
  $region8: #{time_concat_conv2d.1} parent=0 // pred_region
    _
  $region9: #{time_concat_conv2d.1} parent=0 // pred_fallthru
    _
  // Predicated region
  $region10: #{time_concat_conv2d.1} parent=0 // pred_check
    _
  $region11: #{time_concat_conv2d.1} parent=0 // pred_check_branch
    %13 = sbr.rel (0) target = $region13
  $region12: #{time_concat_conv2d.1} parent=0 // pred_region
    _
  $region13: #{time_concat_conv2d.1} parent=0 // pred_fallthru
    _
  %v14 = vld [vmem:[%s1] sm:$0xff]
  %v15 = vld [vmem:[%s2] sm:$0xff]
  %v16 = vld [vmem:[%s0] sm:$0xff]
  %18 = vst [vmem:[#allocation1] ss:$2 sm:$0xff] %v16
  %v19 = vld.sshfl [vmem:[#allocation1] sm:$0xff pattern:$0x75316420]
  %v20 = vld.sshfl [vmem:[#allocation1 + $0x8] sm:$0xff pattern:$0x75316420]
  %v24 = vrot.slane %v19, 4
  %v25 = vrot.slane %v20, 4
  %v26 = vrot.slane 0.0, 4
  %27 = vrot.lane.b32.xlu0 %v24, 127
  %v28 = vpop.permute.xlu0 %27
  %29 = vrot.lane.b32.xlu0 %v25, 127
  %v30 = vpop.permute.xlu0 %29
  %31 = vrot.lane.b32.xlu0 %v26, 127
  %v32 = vpop.permute.xlu0 %31
  %vm33 = vcmask 1039360
  %v34 = vsel %vm33, %v28, %v30
  %v35 = vsel %vm33, %v30, %v32
  %38 = vrot.lane.b32.xlu0 %v19, 126
  %v39 = vpop.permute.xlu0 %38
  %40 = vrot.lane.b32.xlu0 %v20, 126
  %v41 = vpop.permute.xlu0 %40
  %42 = vrot.lane.b32.xlu0 0.0, 126
  %v43 = vpop.permute.xlu0 %42
  %vm44 = vcmask 1031168
  %v45 = vsel %vm44, %v39, %v41
  %v46 = vsel %vm44, %v41, %v43
  %49 = vrot.lane.b32.xlu0 %v24, 112
  %v50 = vpop.permute.xlu0 %49
  %51 = vrot.lane.b32.xlu0 %v25, 112
  %v52 = vpop.permute.xlu0 %51
  %53 = vrot.lane.b32.xlu0 %v26, 112
  %v54 = vpop.permute.xlu0 %53
  %vm55 = vcmask 916480
  %v56 = vsel %vm55, %v50, %v52
  %v57 = vsel %vm55, %v52, %v54
  %60 = vrot.lane.b32.xlu0 %v19, 111
  %v61 = vpop.permute.xlu0 %60
  %62 = vrot.lane.b32.xlu0 %v20, 111
  %v63 = vpop.permute.xlu0 %62
  %64 = vrot.lane.b32.xlu0 0.0, 111
  %v65 = vpop.permute.xlu0 %64
  %vm66 = vcmask 908288
  %v67 = vsel %vm66, %v61, %v63
  %v68 = vsel %vm66, %v63, %v65
  %71 = vrot.lane.b32.xlu0 %v24, 110
  %v72 = vpop.permute.xlu0 %71
  %73 = vrot.lane.b32.xlu0 %v25, 110
  %v74 = vpop.permute.xlu0 %73
  %75 = vrot.lane.b32.xlu0 %v26, 110
  %v76 = vpop.permute.xlu0 %75
  %vm77 = vcmask 900096
  %v78 = vsel %vm77, %v72, %v74
  %v79 = vsel %vm77, %v74, %v76
  %82 = vrot.lane.b32.xlu0 %v19, 96
  %v83 = vpop.permute.xlu0 %82
  %84 = vrot.lane.b32.xlu0 %v20, 96
  %v85 = vpop.permute.xlu0 %84
  %86 = vrot.lane.b32.xlu0 0.0, 96
  %v87 = vpop.permute.xlu0 %86
  %vm88 = vcmask 785408
  %v89 = vsel %vm88, %v83, %v85
  %v90 = vsel %vm88, %v85, %v87
  %93 = vrot.lane.b32.xlu0 %v24, 95
  %v94 = vpop.permute.xlu0 %93
  %95 = vrot.lane.b32.xlu0 %v25, 95
  %v96 = vpop.permute.xlu0 %95
  %97 = vrot.lane.b32.xlu0 %v26, 95
  %v98 = vpop.permute.xlu0 %97
  %vm99 = vcmask 777216
  %v100 = vsel %vm99, %v94, %v96
  %v101 = vsel %vm99, %v96, %v98
  %104 = vrot.lane.b32.xlu0 %v19, 94
  %v105 = vpop.permute.xlu0 %104
  %106 = vrot.lane.b32.xlu0 %v20, 94
  %v107 = vpop.permute.xlu0 %106
  %108 = vrot.lane.b32.xlu0 0.0, 94
  %v109 = vpop.permute.xlu0 %108
  %vm110 = vcmask 769024
  %v111 = vsel %vm110, %v105, %v107
  %v112 = vsel %vm110, %v107, %v109
  %vm113 = vcmask 1043456
  %v114 = vsel %vm113, %v19, %v34
  %v115 = vsel %vm113, %v20, %v35
  %v116 = vsel %vm113, %v45, %v56
  %v117 = vsel %vm113, %v46, %v57
  %v118 = vsel %vm113, %v67, %v78
  %v119 = vsel %vm113, %v68, %v79
  %v120 = vsel %vm113, %v89, %v100
  %v121 = vsel %vm113, %v90, %v101
  %123 = vset.pattern.permute.xlu0 0
  %124 = vperm.xlu0 %123, %v15
  %v125 = vpop.permute.xlu0 %124
  %vm127 = vcmask 293888
  %v129 = vsel %vm127, %v14, 0
  %v131 = vsel %vm113, %v111, 0
  %v133 = vsel %vm113, %v112, 0
  %135 = vmatpush.msra.mxu0 0.0
  %136 = vmatpush.msra.mxu0 0.0
  %137 = vmatpush.msra.mxu0 0.0
  %138 = vmatpush.msra.mxu0 0.0
  %139 = vmatpush.msra.mxu0 0.0
  %140 = vmatpush.msra.mxu0 0.0
  %141 = vmatpush.msra.mxu0 0.0
  %142 = vmatpush.msra.mxu0 0.0
  %143 = vmatpush.msra.mxu0 0.0
  %144 = vmatpush.msra.mxu0 0.0
  %145 = vmatpush.msra.mxu0 0.0
  %146 = vmatpush.msra.mxu0 %v131
  %147 = vmatpush.msra.mxu0 %v120
  %148 = vmatpush.msra.mxu0 %v118
  %149 = vmatpush.msra.mxu0 %v116
  %150 = vmatpush.msra.mxu0 %v114
  %151 = vmatmul.f32.gmra.mxu0 %v129
  %v152 = vpop.f32.mrf.mxu0
  %v153 = vadd.f32 %v125, %v152
  %154 = vdwg.mxu0
  %155 = vmatpush.msra.mxu0 0.0
  %156 = vmatpush.msra.mxu0 0.0
  %157 = vmatpush.msra.mxu0 0.0
  %158 = vmatpush.msra.mxu0 0.0
  %159 = vmatpush.msra.mxu0 0.0
  %160 = vmatpush.msra.mxu0 0.0
  %161 = vmatpush.msra.mxu0 0.0
  %162 = vmatpush.msra.mxu0 0.0
  %163 = vmatpush.msra.mxu0 0.0
  %164 = vmatpush.msra.mxu0 0.0
  %165 = vmatpush.msra.mxu0 0.0
  %166 = vmatpush.msra.mxu0 %v133
  %167 = vmatpush.msra.mxu0 %v121
  %168 = vmatpush.msra.mxu0 %v119
  %169 = vmatpush.msra.mxu0 %v117
  %170 = vmatpush.msra.mxu0 %v115
  %171 = vmatmul.f32.gmra.mxu0 %v129
  %v172 = vpop.f32.mrf.mxu0
  %v173 = vadd.f32 %v125, %v172
  %174 = vdwg.mxu0
  %v176 = vrot.slane %v153, 1
  %v177 = vrot.slane %v153, 2
  %v178 = vrot.slane %v153, 3
  %v179 = vrot.slane %v153, 4
  %v180 = vrot.slane %v153, 5
  %v181 = vrot.slane %v153, 6
  %v182 = vrot.slane %v153, 7
  %vm190 = vcmask 106496
  %191 = vst.msk [vmem:[%s3] sm:$0x1] %vm190, %v153
  %192 = vst.msk [vmem:[%s3 + $0x10] sm:$0x1] %vm190, %v176
  %193 = vst.msk [vmem:[%s3 + $0x20] sm:$0x1] %vm190, %v177
  %194 = vst.msk [vmem:[%s3 + $0x30] sm:$0x1] %vm190, %v178
  %195 = vst.msk [vmem:[%s3 + $0x40] sm:$0x1] %vm190, %v179
  %196 = vst.msk [vmem:[%s3 + $0x50] sm:$0x1] %vm190, %v180
  %197 = vst.msk [vmem:[%s3 + $0x60] sm:$0x1] %vm190, %v181
  %198 = vst.msk [vmem:[%s3 + $0x70] sm:$0x1] %vm190, %v182
  %v199 = vperm.slane %v153, 0
  %v200 = vperm.slane %v176, 0
  %v201 = vperm.slane %v177, 0
  %v202 = vperm.slane %v178, 0
  %v203 = vperm.slane %v179, 0
  %v204 = vperm.slane %v180, 0
  %v205 = vperm.slane %v181, 0
  %v206 = vperm.slane %v182, 0
  %207 = vrot.lane.b32.xlu0 %v199, 112
  %v208 = vpop.permute.xlu0 %207
  %209 = vrot.lane.b32.xlu0 %v200, 112
  %v210 = vpop.permute.xlu0 %209
  %211 = vrot.lane.b32.xlu0 %v201, 112
  %v212 = vpop.permute.xlu0 %211
  %213 = vrot.lane.b32.xlu0 %v202, 112
  %v214 = vpop.permute.xlu0 %213
  %215 = vrot.lane.b32.xlu0 %v203, 112
  %v216 = vpop.permute.xlu0 %215
  %217 = vrot.lane.b32.xlu0 %v204, 112
  %v218 = vpop.permute.xlu0 %217
  %219 = vrot.lane.b32.xlu0 %v205, 112
  %v220 = vpop.permute.xlu0 %219
  %221 = vrot.lane.b32.xlu0 %v206, 112
  %v222 = vpop.permute.xlu0 %221
  %231 = vst.msk [vmem:[%s3 + $0x1] sm:$0x1] %vm190, %v208
  %232 = vst.msk [vmem:[%s3 + $0x11] sm:$0x1] %vm190, %v210
  %233 = vst.msk [vmem:[%s3 + $0x21] sm:$0x1] %vm190, %v212
  %234 = vst.msk [vmem:[%s3 + $0x31] sm:$0x1] %vm190, %v214
  %235 = vst.msk [vmem:[%s3 + $0x41] sm:$0x1] %vm190, %v216
  %236 = vst.msk [vmem:[%s3 + $0x51] sm:$0x1] %vm190, %v218
  %237 = vst.msk [vmem:[%s3 + $0x61] sm:$0x1] %vm190, %v220
  %238 = vst.msk [vmem:[%s3 + $0x71] sm:$0x1] %vm190, %v222
  %239 = vrot.lane.b32.xlu0 %v199, 96
  %v240 = vpop.permute.xlu0 %239
  %241 = vrot.lane.b32.xlu0 %v200, 96
  %v242 = vpop.permute.xlu0 %241
  %243 = vrot.lane.b32.xlu0 %v201, 96
  %v244 = vpop.permute.xlu0 %243
  %245 = vrot.lane.b32.xlu0 %v202, 96
  %v246 = vpop.permute.xlu0 %245
  %247 = vrot.lane.b32.xlu0 %v203, 96
  %v248 = vpop.permute.xlu0 %247
  %249 = vrot.lane.b32.xlu0 %v204, 96
  %v250 = vpop.permute.xlu0 %249
  %251 = vrot.lane.b32.xlu0 %v205, 96
  %v252 = vpop.permute.xlu0 %251
  %253 = vrot.lane.b32.xlu0 %v206, 96
  %v254 = vpop.permute.xlu0 %253
  %263 = vst.msk [vmem:[%s3 + $0x2] sm:$0x1] %vm190, %v240
  %264 = vst.msk [vmem:[%s3 + $0x12] sm:$0x1] %vm190, %v242
  %265 = vst.msk [vmem:[%s3 + $0x22] sm:$0x1] %vm190, %v244
  %266 = vst.msk [vmem:[%s3 + $0x32] sm:$0x1] %vm190, %v246
  %267 = vst.msk [vmem:[%s3 + $0x42] sm:$0x1] %vm190, %v248
  %268 = vst.msk [vmem:[%s3 + $0x52] sm:$0x1] %vm190, %v250
  %269 = vst.msk [vmem:[%s3 + $0x62] sm:$0x1] %vm190, %v252
  %270 = vst.msk [vmem:[%s3 + $0x72] sm:$0x1] %vm190, %v254
  %271 = vrot.lane.b32.xlu0 %v199, 80
  %v272 = vpop.permute.xlu0 %271
  %273 = vrot.lane.b32.xlu0 %v200, 80
  %v274 = vpop.permute.xlu0 %273
  %275 = vrot.lane.b32.xlu0 %v201, 80
  %v276 = vpop.permute.xlu0 %275
  %277 = vrot.lane.b32.xlu0 %v202, 80
  %v278 = vpop.permute.xlu0 %277
  %279 = vrot.lane.b32.xlu0 %v203, 80
  %v280 = vpop.permute.xlu0 %279
  %281 = vrot.lane.b32.xlu0 %v204, 80
  %v282 = vpop.permute.xlu0 %281
  %283 = vrot.lane.b32.xlu0 %v205, 80
  %v284 = vpop.permute.xlu0 %283
  %285 = vrot.lane.b32.xlu0 %v206, 80
  %v286 = vpop.permute.xlu0 %285
  %295 = vst.msk [vmem:[%s3 + $0x3] sm:$0x1] %vm190, %v272
  %296 = vst.msk [vmem:[%s3 + $0x13] sm:$0x1] %vm190, %v274
  %297 = vst.msk [vmem:[%s3 + $0x23] sm:$0x1] %vm190, %v276
  %298 = vst.msk [vmem:[%s3 + $0x33] sm:$0x1] %vm190, %v278
  %299 = vst.msk [vmem:[%s3 + $0x43] sm:$0x1] %vm190, %v280
  %300 = vst.msk [vmem:[%s3 + $0x53] sm:$0x1] %vm190, %v282
  %301 = vst.msk [vmem:[%s3 + $0x63] sm:$0x1] %vm190, %v284
  %302 = vst.msk [vmem:[%s3 + $0x73] sm:$0x1] %vm190, %v286
  %303 = vrot.lane.b32.xlu0 %v199, 64
  %v304 = vpop.permute.xlu0 %303
  %305 = vrot.lane.b32.xlu0 %v200, 64
  %v306 = vpop.permute.xlu0 %305
  %307 = vrot.lane.b32.xlu0 %v201, 64
  %v308 = vpop.permute.xlu0 %307
  %309 = vrot.lane.b32.xlu0 %v202, 64
  %v310 = vpop.permute.xlu0 %309
  %311 = vrot.lane.b32.xlu0 %v203, 64
  %v312 = vpop.permute.xlu0 %311
  %313 = vrot.lane.b32.xlu0 %v204, 64
  %v314 = vpop.permute.xlu0 %313
  %315 = vrot.lane.b32.xlu0 %v205, 64
  %v316 = vpop.permute.xlu0 %315
  %317 = vrot.lane.b32.xlu0 %v206, 64
  %v318 = vpop.permute.xlu0 %317
  %327 = vst.msk [vmem:[%s3 + $0x4] sm:$0x1] %vm190, %v304
  %328 = vst.msk [vmem:[%s3 + $0x14] sm:$0x1] %vm190, %v306
  %329 = vst.msk [vmem:[%s3 + $0x24] sm:$0x1] %vm190, %v308
  %330 = vst.msk [vmem:[%s3 + $0x34] sm:$0x1] %vm190, %v310
  %331 = vst.msk [vmem:[%s3 + $0x44] sm:$0x1] %vm190, %v312
  %332 = vst.msk [vmem:[%s3 + $0x54] sm:$0x1] %vm190, %v314
  %333 = vst.msk [vmem:[%s3 + $0x64] sm:$0x1] %vm190, %v316
  %334 = vst.msk [vmem:[%s3 + $0x74] sm:$0x1] %vm190, %v318
  %335 = vrot.lane.b32.xlu0 %v199, 48
  %v336 = vpop.permute.xlu0 %335
  %337 = vrot.lane.b32.xlu0 %v200, 48
  %v338 = vpop.permute.xlu0 %337
  %339 = vrot.lane.b32.xlu0 %v201, 48
  %v340 = vpop.permute.xlu0 %339
  %341 = vrot.lane.b32.xlu0 %v202, 48
  %v342 = vpop.permute.xlu0 %341
  %343 = vrot.lane.b32.xlu0 %v203, 48
  %v344 = vpop.permute.xlu0 %343
  %345 = vrot.lane.b32.xlu0 %v204, 48
  %v346 = vpop.permute.xlu0 %345
  %347 = vrot.lane.b32.xlu0 %v205, 48
  %v348 = vpop.permute.xlu0 %347
  %349 = vrot.lane.b32.xlu0 %v206, 48
  %v350 = vpop.permute.xlu0 %349
  %359 = vst.msk [vmem:[%s3 + $0x5] sm:$0x1] %vm190, %v336
  %360 = vst.msk [vmem:[%s3 + $0x15] sm:$0x1] %vm190, %v338
  %361 = vst.msk [vmem:[%s3 + $0x25] sm:$0x1] %vm190, %v340
  %362 = vst.msk [vmem:[%s3 + $0x35] sm:$0x1] %vm190, %v342
  %363 = vst.msk [vmem:[%s3 + $0x45] sm:$0x1] %vm190, %v344
  %364 = vst.msk [vmem:[%s3 + $0x55] sm:$0x1] %vm190, %v346
  %365 = vst.msk [vmem:[%s3 + $0x65] sm:$0x1] %vm190, %v348
  %366 = vst.msk [vmem:[%s3 + $0x75] sm:$0x1] %vm190, %v350
  %367 = vrot.lane.b32.xlu0 %v199, 32
  %v368 = vpop.permute.xlu0 %367
  %369 = vrot.lane.b32.xlu0 %v200, 32
  %v370 = vpop.permute.xlu0 %369
  %371 = vrot.lane.b32.xlu0 %v201, 32
  %v372 = vpop.permute.xlu0 %371
  %373 = vrot.lane.b32.xlu0 %v202, 32
  %v374 = vpop.permute.xlu0 %373
  %375 = vrot.lane.b32.xlu0 %v203, 32
  %v376 = vpop.permute.xlu0 %375
  %377 = vrot.lane.b32.xlu0 %v204, 32
  %v378 = vpop.permute.xlu0 %377
  %379 = vrot.lane.b32.xlu0 %v205, 32
  %v380 = vpop.permute.xlu0 %379
  %381 = vrot.lane.b32.xlu0 %v206, 32
  %v382 = vpop.permute.xlu0 %381
  %391 = vst.msk [vmem:[%s3 + $0x6] sm:$0x1] %vm190, %v368
  %392 = vst.msk [vmem:[%s3 + $0x16] sm:$0x1] %vm190, %v370
  %393 = vst.msk [vmem:[%s3 + $0x26] sm:$0x1] %vm190, %v372
  %394 = vst.msk [vmem:[%s3 + $0x36] sm:$0x1] %vm190, %v374
  %395 = vst.msk [vmem:[%s3 + $0x46] sm:$0x1] %vm190, %v376
  %396 = vst.msk [vmem:[%s3 + $0x56] sm:$0x1] %vm190, %v378
  %397 = vst.msk [vmem:[%s3 + $0x66] sm:$0x1] %vm190, %v380
  %398 = vst.msk [vmem:[%s3 + $0x76] sm:$0x1] %vm190, %v382
  %399 = vrot.lane.b32.xlu0 %v199, 16
  %v400 = vpop.permute.xlu0 %399
  %401 = vrot.lane.b32.xlu0 %v200, 16
  %v402 = vpop.permute.xlu0 %401
  %403 = vrot.lane.b32.xlu0 %v201, 16
  %v404 = vpop.permute.xlu0 %403
  %405 = vrot.lane.b32.xlu0 %v202, 16
  %v406 = vpop.permute.xlu0 %405
  %407 = vrot.lane.b32.xlu0 %v203, 16
  %v408 = vpop.permute.xlu0 %407
  %409 = vrot.lane.b32.xlu0 %v204, 16
  %v410 = vpop.permute.xlu0 %409
  %411 = vrot.lane.b32.xlu0 %v205, 16
  %v412 = vpop.permute.xlu0 %411
  %413 = vrot.lane.b32.xlu0 %v206, 16
  %v414 = vpop.permute.xlu0 %413
  %423 = vst.msk [vmem:[%s3 + $0x7] sm:$0x1] %vm190, %v400
  %424 = vst.msk [vmem:[%s3 + $0x17] sm:$0x1] %vm190, %v402
  %425 = vst.msk [vmem:[%s3 + $0x27] sm:$0x1] %vm190, %v404
  %426 = vst.msk [vmem:[%s3 + $0x37] sm:$0x1] %vm190, %v406
  %427 = vst.msk [vmem:[%s3 + $0x47] sm:$0x1] %vm190, %v408
  %428 = vst.msk [vmem:[%s3 + $0x57] sm:$0x1] %vm190, %v410
  %429 = vst.msk [vmem:[%s3 + $0x67] sm:$0x1] %vm190, %v412
  %430 = vst.msk [vmem:[%s3 + $0x77] sm:$0x1] %vm190, %v414
  %v432 = vrot.slane %v173, 1
  %v433 = vrot.slane %v173, 2
  %v434 = vrot.slane %v173, 3
  %v435 = vrot.slane %v173, 4
  %v436 = vrot.slane %v173, 5
  %v437 = vrot.slane %v173, 6
  %v438 = vrot.slane %v173, 7
  %446 = vst.msk [vmem:[%s3 + $0x8] sm:$0x1] %vm190, %v173
  %447 = vst.msk [vmem:[%s3 + $0x18] sm:$0x1] %vm190, %v432
  %448 = vst.msk [vmem:[%s3 + $0x28] sm:$0x1] %vm190, %v433
  %449 = vst.msk [vmem:[%s3 + $0x38] sm:$0x1] %vm190, %v434
  %450 = vst.msk [vmem:[%s3 + $0x48] sm:$0x1] %vm190, %v435
  %451 = vst.msk [vmem:[%s3 + $0x58] sm:$0x1] %vm190, %v436
  %452 = vst.msk [vmem:[%s3 + $0x68] sm:$0x1] %vm190, %v437
  %453 = vst.msk [vmem:[%s3 + $0x78] sm:$0x1] %vm190, %v438
  %v454 = vperm.slane %v173, 0
  %v455 = vperm.slane %v432, 0
  %v456 = vperm.slane %v433, 0
  %v457 = vperm.slane %v434, 0
  %v458 = vperm.slane %v435, 0
  %v459 = vperm.slane %v436, 0
  %v460 = vperm.slane %v437, 0
  %v461 = vperm.slane %v438, 0
  %462 = vrot.lane.b32.xlu0 %v454, 112
  %v463 = vpop.permute.xlu0 %462
  %464 = vrot.lane.b32.xlu0 %v455, 112
  %v465 = vpop.permute.xlu0 %464
  %466 = vrot.lane.b32.xlu0 %v456, 112
  %v467 = vpop.permute.xlu0 %466
  %468 = vrot.lane.b32.xlu0 %v457, 112
  %v469 = vpop.permute.xlu0 %468
  %470 = vrot.lane.b32.xlu0 %v458, 112
  %v471 = vpop.permute.xlu0 %470
  %472 = vrot.lane.b32.xlu0 %v459, 112
  %v473 = vpop.permute.xlu0 %472
  %474 = vrot.lane.b32.xlu0 %v460, 112
  %v475 = vpop.permute.xlu0 %474
  %476 = vrot.lane.b32.xlu0 %v461, 112
  %v477 = vpop.permute.xlu0 %476
  %486 = vst.msk [vmem:[%s3 + $0x9] sm:$0x1] %vm190, %v463
  %487 = vst.msk [vmem:[%s3 + $0x19] sm:$0x1] %vm190, %v465
  %488 = vst.msk [vmem:[%s3 + $0x29] sm:$0x1] %vm190, %v467
  %489 = vst.msk [vmem:[%s3 + $0x39] sm:$0x1] %vm190, %v469
  %490 = vst.msk [vmem:[%s3 + $0x49] sm:$0x1] %vm190, %v471
  %491 = vst.msk [vmem:[%s3 + $0x59] sm:$0x1] %vm190, %v473
  %492 = vst.msk [vmem:[%s3 + $0x69] sm:$0x1] %vm190, %v475
  %493 = vst.msk [vmem:[%s3 + $0x79] sm:$0x1] %vm190, %v477
  %494 = vrot.lane.b32.xlu0 %v454, 96
  %v495 = vpop.permute.xlu0 %494
  %496 = vrot.lane.b32.xlu0 %v455, 96
  %v497 = vpop.permute.xlu0 %496
  %498 = vrot.lane.b32.xlu0 %v456, 96
  %v499 = vpop.permute.xlu0 %498
  %500 = vrot.lane.b32.xlu0 %v457, 96
  %v501 = vpop.permute.xlu0 %500
  %502 = vrot.lane.b32.xlu0 %v458, 96
  %v503 = vpop.permute.xlu0 %502
  %504 = vrot.lane.b32.xlu0 %v459, 96
  %v505 = vpop.permute.xlu0 %504
  %506 = vrot.lane.b32.xlu0 %v460, 96
  %v507 = vpop.permute.xlu0 %506
  %508 = vrot.lane.b32.xlu0 %v461, 96
  %v509 = vpop.permute.xlu0 %508
  %518 = vst.msk [vmem:[%s3 + $0xa] sm:$0x1] %vm190, %v495
  %519 = vst.msk [vmem:[%s3 + $0x1a] sm:$0x1] %vm190, %v497
  %520 = vst.msk [vmem:[%s3 + $0x2a] sm:$0x1] %vm190, %v499
  %521 = vst.msk [vmem:[%s3 + $0x3a] sm:$0x1] %vm190, %v501
  %522 = vst.msk [vmem:[%s3 + $0x4a] sm:$0x1] %vm190, %v503
  %523 = vst.msk [vmem:[%s3 + $0x5a] sm:$0x1] %vm190, %v505
  %524 = vst.msk [vmem:[%s3 + $0x6a] sm:$0x1] %vm190, %v507
  %525 = vst.msk [vmem:[%s3 + $0x7a] sm:$0x1] %vm190, %v509
  %526 = vrot.lane.b32.xlu0 %v454, 80
  %v527 = vpop.permute.xlu0 %526
  %528 = vrot.lane.b32.xlu0 %v455, 80
  %v529 = vpop.permute.xlu0 %528
  %530 = vrot.lane.b32.xlu0 %v456, 80
  %v531 = vpop.permute.xlu0 %530
  %532 = vrot.lane.b32.xlu0 %v457, 80
  %v533 = vpop.permute.xlu0 %532
  %534 = vrot.lane.b32.xlu0 %v458, 80
  %v535 = vpop.permute.xlu0 %534
  %536 = vrot.lane.b32.xlu0 %v459, 80
  %v537 = vpop.permute.xlu0 %536
  %538 = vrot.lane.b32.xlu0 %v460, 80
  %v539 = vpop.permute.xlu0 %538
  %540 = vrot.lane.b32.xlu0 %v461, 80
  %v541 = vpop.permute.xlu0 %540
  %550 = vst.msk [vmem:[%s3 + $0xb] sm:$0x1] %vm190, %v527
  %551 = vst.msk [vmem:[%s3 + $0x1b] sm:$0x1] %vm190, %v529
  %552 = vst.msk [vmem:[%s3 + $0x2b] sm:$0x1] %vm190, %v531
  %553 = vst.msk [vmem:[%s3 + $0x3b] sm:$0x1] %vm190, %v533
  %554 = vst.msk [vmem:[%s3 + $0x4b] sm:$0x1] %vm190, %v535
  %555 = vst.msk [vmem:[%s3 + $0x5b] sm:$0x1] %vm190, %v537
  %556 = vst.msk [vmem:[%s3 + $0x6b] sm:$0x1] %vm190, %v539
  %557 = vst.msk [vmem:[%s3 + $0x7b] sm:$0x1] %vm190, %v541
  %558 = vrot.lane.b32.xlu0 %v454, 64
  %v559 = vpop.permute.xlu0 %558
  %560 = vrot.lane.b32.xlu0 %v455, 64
  %v561 = vpop.permute.xlu0 %560
  %562 = vrot.lane.b32.xlu0 %v456, 64
  %v563 = vpop.permute.xlu0 %562
  %564 = vrot.lane.b32.xlu0 %v457, 64
  %v565 = vpop.permute.xlu0 %564
  %566 = vrot.lane.b32.xlu0 %v458, 64
  %v567 = vpop.permute.xlu0 %566
  %568 = vrot.lane.b32.xlu0 %v459, 64
  %v569 = vpop.permute.xlu0 %568
  %570 = vrot.lane.b32.xlu0 %v460, 64
  %v571 = vpop.permute.xlu0 %570
  %572 = vrot.lane.b32.xlu0 %v461, 64
  %v573 = vpop.permute.xlu0 %572
  %582 = vst.msk [vmem:[%s3 + $0xc] sm:$0x1] %vm190, %v559
  %583 = vst.msk [vmem:[%s3 + $0x1c] sm:$0x1] %vm190, %v561
  %584 = vst.msk [vmem:[%s3 + $0x2c] sm:$0x1] %vm190, %v563
  %585 = vst.msk [vmem:[%s3 + $0x3c] sm:$0x1] %vm190, %v565
  %586 = vst.msk [vmem:[%s3 + $0x4c] sm:$0x1] %vm190, %v567
  %587 = vst.msk [vmem:[%s3 + $0x5c] sm:$0x1] %vm190, %v569
  %588 = vst.msk [vmem:[%s3 + $0x6c] sm:$0x1] %vm190, %v571
  %589 = vst.msk [vmem:[%s3 + $0x7c] sm:$0x1] %vm190, %v573
  %590 = vrot.lane.b32.xlu0 %v454, 48
  %v591 = vpop.permute.xlu0 %590
  %592 = vrot.lane.b32.xlu0 %v455, 48
  %v593 = vpop.permute.xlu0 %592
  %594 = vrot.lane.b32.xlu0 %v456, 48
  %v595 = vpop.permute.xlu0 %594
  %596 = vrot.lane.b32.xlu0 %v457, 48
  %v597 = vpop.permute.xlu0 %596
  %598 = vrot.lane.b32.xlu0 %v458, 48
  %v599 = vpop.permute.xlu0 %598
  %600 = vrot.lane.b32.xlu0 %v459, 48
  %v601 = vpop.permute.xlu0 %600
  %602 = vrot.lane.b32.xlu0 %v460, 48
  %v603 = vpop.permute.xlu0 %602
  %604 = vrot.lane.b32.xlu0 %v461, 48
  %v605 = vpop.permute.xlu0 %604
  %614 = vst.msk [vmem:[%s3 + $0xd] sm:$0x1] %vm190, %v591
  %615 = vst.msk [vmem:[%s3 + $0x1d] sm:$0x1] %vm190, %v593
  %616 = vst.msk [vmem:[%s3 + $0x2d] sm:$0x1] %vm190, %v595
  %617 = vst.msk [vmem:[%s3 + $0x3d] sm:$0x1] %vm190, %v597
  %618 = vst.msk [vmem:[%s3 + $0x4d] sm:$0x1] %vm190, %v599
  %619 = vst.msk [vmem:[%s3 + $0x5d] sm:$0x1] %vm190, %v601
  %620 = vst.msk [vmem:[%s3 + $0x6d] sm:$0x1] %vm190, %v603
  %621 = vst.msk [vmem:[%s3 + $0x7d] sm:$0x1] %vm190, %v605
  %s622 = scalar_lea.vmem %s0, 8
  %v623 = vld [vmem:[%s622] sm:$0xff]
  %625 = vst [vmem:[#allocation1] ss:$2 sm:$0xff] %v623
  %v626 = vld.sshfl [vmem:[#allocation1] sm:$0xff pattern:$0x75316420]
  %v627 = vld.sshfl [vmem:[#allocation1 + $0x8] sm:$0xff pattern:$0x75316420]
  %v630 = vrot.slane %v626, 4
  %v631 = vrot.slane %v627, 4
  %632 = vrot.lane.b32.xlu0 %v630, 127
  %v633 = vpop.permute.xlu0 %632
  %634 = vrot.lane.b32.xlu0 %v631, 127
  %v635 = vpop.permute.xlu0 %634
  %v636 = vsel %vm33, %v633, %v635
  %v637 = vsel %vm33, %v635, %v32
  %640 = vrot.lane.b32.xlu0 %v626, 126
  %v641 = vpop.permute.xlu0 %640
  %642 = vrot.lane.b32.xlu0 %v627, 126
  %v643 = vpop.permute.xlu0 %642
  %v644 = vsel %vm44, %v641, %v643
  %v645 = vsel %vm44, %v643, %v43
  %648 = vrot.lane.b32.xlu0 %v630, 112
  %v649 = vpop.permute.xlu0 %648
  %650 = vrot.lane.b32.xlu0 %v631, 112
  %v651 = vpop.permute.xlu0 %650
  %v652 = vsel %vm55, %v649, %v651
  %v653 = vsel %vm55, %v651, %v54
  %656 = vrot.lane.b32.xlu0 %v626, 111
  %v657 = vpop.permute.xlu0 %656
  %658 = vrot.lane.b32.xlu0 %v627, 111
  %v659 = vpop.permute.xlu0 %658
  %v660 = vsel %vm66, %v657, %v659
  %v661 = vsel %vm66, %v659, %v65
  %664 = vrot.lane.b32.xlu0 %v630, 110
  %v665 = vpop.permute.xlu0 %664
  %666 = vrot.lane.b32.xlu0 %v631, 110
  %v667 = vpop.permute.xlu0 %666
  %v668 = vsel %vm77, %v665, %v667
  %v669 = vsel %vm77, %v667, %v76
  %672 = vrot.lane.b32.xlu0 %v626, 96
  %v673 = vpop.permute.xlu0 %672
  %674 = vrot.lane.b32.xlu0 %v627, 96
  %v675 = vpop.permute.xlu0 %674
  %v676 = vsel %vm88, %v673, %v675
  %v677 = vsel %vm88, %v675, %v87
  %680 = vrot.lane.b32.xlu0 %v630, 95
  %v681 = vpop.permute.xlu0 %680
  %682 = vrot.lane.b32.xlu0 %v631, 95
  %v683 = vpop.permute.xlu0 %682
  %v684 = vsel %vm99, %v681, %v683
  %v685 = vsel %vm99, %v683, %v98
  %688 = vrot.lane.b32.xlu0 %v626, 94
  %v689 = vpop.permute.xlu0 %688
  %690 = vrot.lane.b32.xlu0 %v627, 94
  %v691 = vpop.permute.xlu0 %690
  %v692 = vsel %vm110, %v689, %v691
  %v693 = vsel %vm110, %v691, %v109
  %v694 = vsel %vm113, %v626, %v636
  %v695 = vsel %vm113, %v627, %v637
  %v696 = vsel %vm113, %v644, %v652
  %v697 = vsel %vm113, %v645, %v653
  %v698 = vsel %vm113, %v660, %v668
  %v699 = vsel %vm113, %v661, %v669
  %v700 = vsel %vm113, %v676, %v684
  %v701 = vsel %vm113, %v677, %v685
  %v702 = vsel %vm113, %v692, 0
  %v704 = vsel %vm113, %v693, 0
  %706 = vmatpush.msra.mxu0 0.0
  %707 = vmatpush.msra.mxu0 0.0
  %708 = vmatpush.msra.mxu0 0.0
  %709 = vmatpush.msra.mxu0 0.0
  %710 = vmatpush.msra.mxu0 0.0
  %711 = vmatpush.msra.mxu0 0.0
  %712 = vmatpush.msra.mxu0 0.0
  %713 = vmatpush.msra.mxu0 0.0
  %714 = vmatpush.msra.mxu0 0.0
  %715 = vmatpush.msra.mxu0 0.0
  %716 = vmatpush.msra.mxu0 0.0
  %717 = vmatpush.msra.mxu0 %v702
  %718 = vmatpush.msra.mxu0 %v700
  %719 = vmatpush.msra.mxu0 %v698
  %720 = vmatpush.msra.mxu0 %v696
  %721 = vmatpush.msra.mxu0 %v694
  %722 = vmatmul.f32.gmra.mxu0 %v129
  %v723 = vpop.f32.mrf.mxu0
  %v724 = vadd.f32 %v125, %v723
  %725 = vdwg.mxu0
  %726 = vmatpush.msra.mxu0 0.0
  %727 = vmatpush.msra.mxu0 0.0
  %728 = vmatpush.msra.mxu0 0.0
  %729 = vmatpush.msra.mxu0 0.0
  %730 = vmatpush.msra.mxu0 0.0
  %731 = vmatpush.msra.mxu0 0.0
  %732 = vmatpush.msra.mxu0 0.0
  %733 = vmatpush.msra.mxu0 0.0
  %734 = vmatpush.msra.mxu0 0.0
  %735 = vmatpush.msra.mxu0 0.0
  %736 = vmatpush.msra.mxu0 0.0
  %737 = vmatpush.msra.mxu0 %v704
  %738 = vmatpush.msra.mxu0 %v701
  %739 = vmatpush.msra.mxu0 %v699
  %740 = vmatpush.msra.mxu0 %v697
  %741 = vmatpush.msra.mxu0 %v695
  %742 = vmatmul.f32.gmra.mxu0 %v129
  %v743 = vpop.f32.mrf.mxu0
  %v744 = vadd.f32 %v125, %v743
  %745 = vdwg.mxu0
  %v747 = vrot.slane %v724, 1
  %v748 = vrot.slane %v724, 2
  %v749 = vrot.slane %v724, 3
  %v750 = vrot.slane %v724, 4
  %v751 = vrot.slane %v724, 5
  %v752 = vrot.slane %v724, 6
  %v753 = vrot.slane %v724, 7
  %s761 = scalar_lea.vmem %s3, 128
  %762 = vst.msk [vmem:[%s761] sm:$0x1] %vm190, %v724
  %763 = vst.msk [vmem:[%s761 + $0x10] sm:$0x1] %vm190, %v747
  %764 = vst.msk [vmem:[%s761 + $0x20] sm:$0x1] %vm190, %v748
  %765 = vst.msk [vmem:[%s761 + $0x30] sm:$0x1] %vm190, %v749
  %766 = vst.msk [vmem:[%s761 + $0x40] sm:$0x1] %vm190, %v750
  %767 = vst.msk [vmem:[%s761 + $0x50] sm:$0x1] %vm190, %v751
  %768 = vst.msk [vmem:[%s761 + $0x60] sm:$0x1] %vm190, %v752
  %769 = vst.msk [vmem:[%s761 + $0x70] sm:$0x1] %vm190, %v753
  %v770 = vperm.slane %v724, 0
  %v771 = vperm.slane %v747, 0
  %v772 = vperm.slane %v748, 0
  %v773 = vperm.slane %v749, 0
  %v774 = vperm.slane %v750, 0
  %v775 = vperm.slane %v751, 0
  %v776 = vperm.slane %v752, 0
  %v777 = vperm.slane %v753, 0
  %778 = vrot.lane.b32.xlu0 %v770, 112
  %v779 = vpop.permute.xlu0 %778
  %780 = vrot.lane.b32.xlu0 %v771, 112
  %v781 = vpop.permute.xlu0 %780
  %782 = vrot.lane.b32.xlu0 %v772, 112
  %v783 = vpop.permute.xlu0 %782
  %784 = vrot.lane.b32.xlu0 %v773, 112
  %v785 = vpop.permute.xlu0 %784
  %786 = vrot.lane.b32.xlu0 %v774, 112
  %v787 = vpop.permute.xlu0 %786
  %788 = vrot.lane.b32.xlu0 %v775, 112
  %v789 = vpop.permute.xlu0 %788
  %790 = vrot.lane.b32.xlu0 %v776, 112
  %v791 = vpop.permute.xlu0 %790
  %792 = vrot.lane.b32.xlu0 %v777, 112
  %v793 = vpop.permute.xlu0 %792
  %802 = vst.msk [vmem:[%s761 + $0x1] sm:$0x1] %vm190, %v779
  %803 = vst.msk [vmem:[%s761 + $0x11] sm:$0x1] %vm190, %v781
  %804 = vst.msk [vmem:[%s761 + $0x21] sm:$0x1] %vm190, %v783
  %805 = vst.msk [vmem:[%s761 + $0x31] sm:$0x1] %vm190, %v785
  %806 = vst.msk [vmem:[%s761 + $0x41] sm:$0x1] %vm190, %v787
  %807 = vst.msk [vmem:[%s761 + $0x51] sm:$0x1] %vm190, %v789
  %808 = vst.msk [vmem:[%s761 + $0x61] sm:$0x1] %vm190, %v791
  %809 = vst.msk [vmem:[%s761 + $0x71] sm:$0x1] %vm190, %v793
  %810 = vrot.lane.b32.xlu0 %v770, 96
  %v811 = vpop.permute.xlu0 %810
  %812 = vrot.lane.b32.xlu0 %v771, 96
  %v813 = vpop.permute.xlu0 %812
  %814 = vrot.lane.b32.xlu0 %v772, 96
  %v815 = vpop.permute.xlu0 %814
  %816 = vrot.lane.b32.xlu0 %v773, 96
  %v817 = vpop.permute.xlu0 %816
  %818 = vrot.lane.b32.xlu0 %v774, 96
  %v819 = vpop.permute.xlu0 %818
  %820 = vrot.lane.b32.xlu0 %v775, 96
  %v821 = vpop.permute.xlu0 %820
  %822 = vrot.lane.b32.xlu0 %v776, 96
  %v823 = vpop.permute.xlu0 %822
  %824 = vrot.lane.b32.xlu0 %v777, 96
  %v825 = vpop.permute.xlu0 %824
  %834 = vst.msk [vmem:[%s761 + $0x2] sm:$0x1] %vm190, %v811
  %835 = vst.msk [vmem:[%s761 + $0x12] sm:$0x1] %vm190, %v813
  %836 = vst.msk [vmem:[%s761 + $0x22] sm:$0x1] %vm190, %v815
  %837 = vst.msk [vmem:[%s761 + $0x32] sm:$0x1] %vm190, %v817
  %838 = vst.msk [vmem:[%s761 + $0x42] sm:$0x1] %vm190, %v819
  %839 = vst.msk [vmem:[%s761 + $0x52] sm:$0x1] %vm190, %v821
  %840 = vst.msk [vmem:[%s761 + $0x62] sm:$0x1] %vm190, %v823
  %841 = vst.msk [vmem:[%s761 + $0x72] sm:$0x1] %vm190, %v825
  %842 = vrot.lane.b32.xlu0 %v770, 80
  %v843 = vpop.permute.xlu0 %842
  %844 = vrot.lane.b32.xlu0 %v771, 80
  %v845 = vpop.permute.xlu0 %844
  %846 = vrot.lane.b32.xlu0 %v772, 80
  %v847 = vpop.permute.xlu0 %846
  %848 = vrot.lane.b32.xlu0 %v773, 80
  %v849 = vpop.permute.xlu0 %848
  %850 = vrot.lane.b32.xlu0 %v774, 80
  %v851 = vpop.permute.xlu0 %850
  %852 = vrot.lane.b32.xlu0 %v775, 80
  %v853 = vpop.permute.xlu0 %852
  %854 = vrot.lane.b32.xlu0 %v776, 80
  %v855 = vpop.permute.xlu0 %854
  %856 = vrot.lane.b32.xlu0 %v777, 80
  %v857 = vpop.permute.xlu0 %856
  %866 = vst.msk [vmem:[%s761 + $0x3] sm:$0x1] %vm190, %v843
  %867 = vst.msk [vmem:[%s761 + $0x13] sm:$0x1] %vm190, %v845
  %868 = vst.msk [vmem:[%s761 + $0x23] sm:$0x1] %vm190, %v847
  %869 = vst.msk [vmem:[%s761 + $0x33] sm:$0x1] %vm190, %v849
  %870 = vst.msk [vmem:[%s761 + $0x43] sm:$0x1] %vm190, %v851
  %871 = vst.msk [vmem:[%s761 + $0x53] sm:$0x1] %vm190, %v853
  %872 = vst.msk [vmem:[%s761 + $0x63] sm:$0x1] %vm190, %v855
  %873 = vst.msk [vmem:[%s761 + $0x73] sm:$0x1] %vm190, %v857
  %874 = vrot.lane.b32.xlu0 %v770, 64
  %v875 = vpop.permute.xlu0 %874
  %876 = vrot.lane.b32.xlu0 %v771, 64
  %v877 = vpop.permute.xlu0 %876
  %878 = vrot.lane.b32.xlu0 %v772, 64
  %v879 = vpop.permute.xlu0 %878
  %880 = vrot.lane.b32.xlu0 %v773, 64
  %v881 = vpop.permute.xlu0 %880
  %882 = vrot.lane.b32.xlu0 %v774, 64
  %v883 = vpop.permute.xlu0 %882
  %884 = vrot.lane.b32.xlu0 %v775, 64
  %v885 = vpop.permute.xlu0 %884
  %886 = vrot.lane.b32.xlu0 %v776, 64
  %v887 = vpop.permute.xlu0 %886
  %888 = vrot.lane.b32.xlu0 %v777, 64
  %v889 = vpop.permute.xlu0 %888
  %898 = vst.msk [vmem:[%s761 + $0x4] sm:$0x1] %vm190, %v875
  %899 = vst.msk [vmem:[%s761 + $0x14] sm:$0x1] %vm190, %v877
  %900 = vst.msk [vmem:[%s761 + $0x24] sm:$0x1] %vm190, %v879
  %901 = vst.msk [vmem:[%s761 + $0x34] sm:$0x1] %vm190, %v881
  %902 = vst.msk [vmem:[%s761 + $0x44] sm:$0x1] %vm190, %v883
  %903 = vst.msk [vmem:[%s761 + $0x54] sm:$0x1] %vm190, %v885
  %904 = vst.msk [vmem:[%s761 + $0x64] sm:$0x1] %vm190, %v887
  %905 = vst.msk [vmem:[%s761 + $0x74] sm:$0x1] %vm190, %v889
  %906 = vrot.lane.b32.xlu0 %v770, 48
  %v907 = vpop.permute.xlu0 %906
  %908 = vrot.lane.b32.xlu0 %v771, 48
  %v909 = vpop.permute.xlu0 %908
  %910 = vrot.lane.b32.xlu0 %v772, 48
  %v911 = vpop.permute.xlu0 %910
  %912 = vrot.lane.b32.xlu0 %v773, 48
  %v913 = vpop.permute.xlu0 %912
  %914 = vrot.lane.b32.xlu0 %v774, 48
  %v915 = vpop.permute.xlu0 %914
  %916 = vrot.lane.b32.xlu0 %v775, 48
  %v917 = vpop.permute.xlu0 %916
  %918 = vrot.lane.b32.xlu0 %v776, 48
  %v919 = vpop.permute.xlu0 %918
  %920 = vrot.lane.b32.xlu0 %v777, 48
  %v921 = vpop.permute.xlu0 %920
  %930 = vst.msk [vmem:[%s761 + $0x5] sm:$0x1] %vm190, %v907
  %931 = vst.msk [vmem:[%s761 + $0x15] sm:$0x1] %vm190, %v909
  %932 = vst.msk [vmem:[%s761 + $0x25] sm:$0x1] %vm190, %v911
  %933 = vst.msk [vmem:[%s761 + $0x35] sm:$0x1] %vm190, %v913
  %934 = vst.msk [vmem:[%s761 + $0x45] sm:$0x1] %vm190, %v915
  %935 = vst.msk [vmem:[%s761 + $0x55] sm:$0x1] %vm190, %v917
  %936 = vst.msk [vmem:[%s761 + $0x65] sm:$0x1] %vm190, %v919
  %937 = vst.msk [vmem:[%s761 + $0x75] sm:$0x1] %vm190, %v921
  %938 = vrot.lane.b32.xlu0 %v770, 32
  %v939 = vpop.permute.xlu0 %938
  %940 = vrot.lane.b32.xlu0 %v771, 32
  %v941 = vpop.permute.xlu0 %940
  %942 = vrot.lane.b32.xlu0 %v772, 32
  %v943 = vpop.permute.xlu0 %942
  %944 = vrot.lane.b32.xlu0 %v773, 32
  %v945 = vpop.permute.xlu0 %944
  %946 = vrot.lane.b32.xlu0 %v774, 32
  %v947 = vpop.permute.xlu0 %946
  %948 = vrot.lane.b32.xlu0 %v775, 32
  %v949 = vpop.permute.xlu0 %948
  %950 = vrot.lane.b32.xlu0 %v776, 32
  %v951 = vpop.permute.xlu0 %950
  %952 = vrot.lane.b32.xlu0 %v777, 32
  %v953 = vpop.permute.xlu0 %952
  %962 = vst.msk [vmem:[%s761 + $0x6] sm:$0x1] %vm190, %v939
  %963 = vst.msk [vmem:[%s761 + $0x16] sm:$0x1] %vm190, %v941
  %964 = vst.msk [vmem:[%s761 + $0x26] sm:$0x1] %vm190, %v943
  %965 = vst.msk [vmem:[%s761 + $0x36] sm:$0x1] %vm190, %v945
  %966 = vst.msk [vmem:[%s761 + $0x46] sm:$0x1] %vm190, %v947
  %967 = vst.msk [vmem:[%s761 + $0x56] sm:$0x1] %vm190, %v949
  %968 = vst.msk [vmem:[%s761 + $0x66] sm:$0x1] %vm190, %v951
  %969 = vst.msk [vmem:[%s761 + $0x76] sm:$0x1] %vm190, %v953
  %970 = vrot.lane.b32.xlu0 %v770, 16
  %v971 = vpop.permute.xlu0 %970
  %972 = vrot.lane.b32.xlu0 %v771, 16
  %v973 = vpop.permute.xlu0 %972
  %974 = vrot.lane.b32.xlu0 %v772, 16
  %v975 = vpop.permute.xlu0 %974
  %976 = vrot.lane.b32.xlu0 %v773, 16
  %v977 = vpop.permute.xlu0 %976
  %978 = vrot.lane.b32.xlu0 %v774, 16
  %v979 = vpop.permute.xlu0 %978
  %980 = vrot.lane.b32.xlu0 %v775, 16
  %v981 = vpop.permute.xlu0 %980
  %982 = vrot.lane.b32.xlu0 %v776, 16
  %v983 = vpop.permute.xlu0 %982
  %984 = vrot.lane.b32.xlu0 %v777, 16
  %v985 = vpop.permute.xlu0 %984
  %994 = vst.msk [vmem:[%s761 + $0x7] sm:$0x1] %vm190, %v971
  %995 = vst.msk [vmem:[%s761 + $0x17] sm:$0x1] %vm190, %v973
  %996 = vst.msk [vmem:[%s761 + $0x27] sm:$0x1] %vm190, %v975
  %997 = vst.msk [vmem:[%s761 + $0x37] sm:$0x1] %vm190, %v977
  %998 = vst.msk [vmem:[%s761 + $0x47] sm:$0x1] %vm190, %v979
  %999 = vst.msk [vmem:[%s761 + $0x57] sm:$0x1] %vm190, %v981
  %1000 = vst.msk [vmem:[%s761 + $0x67] sm:$0x1] %vm190, %v983
  %1001 = vst.msk [vmem:[%s761 + $0x77] sm:$0x1] %vm190, %v985
  %v1003 = vrot.slane %v744, 1
  %v1004 = vrot.slane %v744, 2
  %v1005 = vrot.slane %v744, 3
  %v1006 = vrot.slane %v744, 4
  %v1007 = vrot.slane %v744, 5
  %v1008 = vrot.slane %v744, 6
  %v1009 = vrot.slane %v744, 7
  %1017 = vst.msk [vmem:[%s761 + $0x8] sm:$0x1] %vm190, %v744
  %1018 = vst.msk [vmem:[%s761 + $0x18] sm:$0x1] %vm190, %v1003
  %1019 = vst.msk [vmem:[%s761 + $0x28] sm:$0x1] %vm190, %v1004
  %1020 = vst.msk [vmem:[%s761 + $0x38] sm:$0x1] %vm190, %v1005
  %1021 = vst.msk [vmem:[%s761 + $0x48] sm:$0x1] %vm190, %v1006
  %1022 = vst.msk [vmem:[%s761 + $0x58] sm:$0x1] %vm190, %v1007
  %1023 = vst.msk [vmem:[%s761 + $0x68] sm:$0x1] %vm190, %v1008
  %1024 = vst.msk [vmem:[%s761 + $0x78] sm:$0x1] %vm190, %v1009
  %v1025 = vperm.slane %v744, 0
  %v1026 = vperm.slane %v1003, 0
  %v1027 = vperm.slane %v1004, 0
  %v1028 = vperm.slane %v1005, 0
  %v1029 = vperm.slane %v1006, 0
  %v1030 = vperm.slane %v1007, 0
  %v1031 = vperm.slane %v1008, 0
  %v1032 = vperm.slane %v1009, 0
  %1033 = vrot.lane.b32.xlu0 %v1025, 112
  %v1034 = vpop.permute.xlu0 %1033
  %1035 = vrot.lane.b32.xlu0 %v1026, 112
  %v1036 = vpop.permute.xlu0 %1035
  %1037 = vrot.lane.b32.xlu0 %v1027, 112
  %v1038 = vpop.permute.xlu0 %1037
  %1039 = vrot.lane.b32.xlu0 %v1028, 112
  %v1040 = vpop.permute.xlu0 %1039
  %1041 = vrot.lane.b32.xlu0 %v1029, 112
  %v1042 = vpop.permute.xlu0 %1041
  %1043 = vrot.lane.b32.xlu0 %v1030, 112
  %v1044 = vpop.permute.xlu0 %1043
  %1045 = vrot.lane.b32.xlu0 %v1031, 112
  %v1046 = vpop.permute.xlu0 %1045
  %1047 = vrot.lane.b32.xlu0 %v1032, 112
  %v1048 = vpop.permute.xlu0 %1047
  %1057 = vst.msk [vmem:[%s761 + $0x9] sm:$0x1] %vm190, %v1034
  %1058 = vst.msk [vmem:[%s761 + $0x19] sm:$0x1] %vm190, %v1036
  %1059 = vst.msk [vmem:[%s761 + $0x29] sm:$0x1] %vm190, %v1038
  %1060 = vst.msk [vmem:[%s761 + $0x39] sm:$0x1] %vm190, %v1040
  %1061 = vst.msk [vmem:[%s761 + $0x49] sm:$0x1] %vm190, %v1042
  %1062 = vst.msk [vmem:[%s761 + $0x59] sm:$0x1] %vm190, %v1044
  %1063 = vst.msk [vmem:[%s761 + $0x69] sm:$0x1] %vm190, %v1046
  %1064 = vst.msk [vmem:[%s761 + $0x79] sm:$0x1] %vm190, %v1048
  %1065 = vrot.lane.b32.xlu0 %v1025, 96
  %v1066 = vpop.permute.xlu0 %1065
  %1067 = vrot.lane.b32.xlu0 %v1026, 96
  %v1068 = vpop.permute.xlu0 %1067
  %1069 = vrot.lane.b32.xlu0 %v1027, 96
  %v1070 = vpop.permute.xlu0 %1069
  %1071 = vrot.lane.b32.xlu0 %v1028, 96
  %v1072 = vpop.permute.xlu0 %1071
  %1073 = vrot.lane.b32.xlu0 %v1029, 96
  %v1074 = vpop.permute.xlu0 %1073
  %1075 = vrot.lane.b32.xlu0 %v1030, 96
  %v1076 = vpop.permute.xlu0 %1075
  %1077 = vrot.lane.b32.xlu0 %v1031, 96
  %v1078 = vpop.permute.xlu0 %1077
  %1079 = vrot.lane.b32.xlu0 %v1032, 96
  %v1080 = vpop.permute.xlu0 %1079
  %1089 = vst.msk [vmem:[%s761 + $0xa] sm:$0x1] %vm190, %v1066
  %1090 = vst.msk [vmem:[%s761 + $0x1a] sm:$0x1] %vm190, %v1068
  %1091 = vst.msk [vmem:[%s761 + $0x2a] sm:$0x1] %vm190, %v1070
  %1092 = vst.msk [vmem:[%s761 + $0x3a] sm:$0x1] %vm190, %v1072
  %1093 = vst.msk [vmem:[%s761 + $0x4a] sm:$0x1] %vm190, %v1074
  %1094 = vst.msk [vmem:[%s761 + $0x5a] sm:$0x1] %vm190, %v1076
  %1095 = vst.msk [vmem:[%s761 + $0x6a] sm:$0x1] %vm190, %v1078
  %1096 = vst.msk [vmem:[%s761 + $0x7a] sm:$0x1] %vm190, %v1080
  %1097 = vrot.lane.b32.xlu0 %v1025, 80
  %v1098 = vpop.permute.xlu0 %1097
  %1099 = vrot.lane.b32.xlu0 %v1026, 80
  %v1100 = vpop.permute.xlu0 %1099
  %1101 = vrot.lane.b32.xlu0 %v1027, 80
  %v1102 = vpop.permute.xlu0 %1101
  %1103 = vrot.lane.b32.xlu0 %v1028, 80
  %v1104 = vpop.permute.xlu0 %1103
  %1105 = vrot.lane.b32.xlu0 %v1029, 80
  %v1106 = vpop.permute.xlu0 %1105
  %1107 = vrot.lane.b32.xlu0 %v1030, 80
  %v1108 = vpop.permute.xlu0 %1107
  %1109 = vrot.lane.b32.xlu0 %v1031, 80
  %v1110 = vpop.permute.xlu0 %1109
  %1111 = vrot.lane.b32.xlu0 %v1032, 80
  %v1112 = vpop.permute.xlu0 %1111
  %1121 = vst.msk [vmem:[%s761 + $0xb] sm:$0x1] %vm190, %v1098
  %1122 = vst.msk [vmem:[%s761 + $0x1b] sm:$0x1] %vm190, %v1100
  %1123 = vst.msk [vmem:[%s761 + $0x2b] sm:$0x1] %vm190, %v1102
  %1124 = vst.msk [vmem:[%s761 + $0x3b] sm:$0x1] %vm190, %v1104
  %1125 = vst.msk [vmem:[%s761 + $0x4b] sm:$0x1] %vm190, %v1106
  %1126 = vst.msk [vmem:[%s761 + $0x5b] sm:$0x1] %vm190, %v1108
  %1127 = vst.msk [vmem:[%s761 + $0x6b] sm:$0x1] %vm190, %v1110
  %1128 = vst.msk [vmem:[%s761 + $0x7b] sm:$0x1] %vm190, %v1112
  %1129 = vrot.lane.b32.xlu0 %v1025, 64
  %v1130 = vpop.permute.xlu0 %1129
  %1131 = vrot.lane.b32.xlu0 %v1026, 64
  %v1132 = vpop.permute.xlu0 %1131
  %1133 = vrot.lane.b32.xlu0 %v1027, 64
  %v1134 = vpop.permute.xlu0 %1133
  %1135 = vrot.lane.b32.xlu0 %v1028, 64
  %v1136 = vpop.permute.xlu0 %1135
  %1137 = vrot.lane.b32.xlu0 %v1029, 64
  %v1138 = vpop.permute.xlu0 %1137
  %1139 = vrot.lane.b32.xlu0 %v1030, 64
  %v1140 = vpop.permute.xlu0 %1139
  %1141 = vrot.lane.b32.xlu0 %v1031, 64
  %v1142 = vpop.permute.xlu0 %1141
  %1143 = vrot.lane.b32.xlu0 %v1032, 64
  %v1144 = vpop.permute.xlu0 %1143
  %1153 = vst.msk [vmem:[%s761 + $0xc] sm:$0x1] %vm190, %v1130
  %1154 = vst.msk [vmem:[%s761 + $0x1c] sm:$0x1] %vm190, %v1132
  %1155 = vst.msk [vmem:[%s761 + $0x2c] sm:$0x1] %vm190, %v1134
  %1156 = vst.msk [vmem:[%s761 + $0x3c] sm:$0x1] %vm190, %v1136
  %1157 = vst.msk [vmem:[%s761 + $0x4c] sm:$0x1] %vm190, %v1138
  %1158 = vst.msk [vmem:[%s761 + $0x5c] sm:$0x1] %vm190, %v1140
  %1159 = vst.msk [vmem:[%s761 + $0x6c] sm:$0x1] %vm190, %v1142
  %1160 = vst.msk [vmem:[%s761 + $0x7c] sm:$0x1] %vm190, %v1144
  %1161 = vrot.lane.b32.xlu0 %v1025, 48
  %v1162 = vpop.permute.xlu0 %1161
  %1163 = vrot.lane.b32.xlu0 %v1026, 48
  %v1164 = vpop.permute.xlu0 %1163
  %1165 = vrot.lane.b32.xlu0 %v1027, 48
  %v1166 = vpop.permute.xlu0 %1165
  %1167 = vrot.lane.b32.xlu0 %v1028, 48
  %v1168 = vpop.permute.xlu0 %1167
  %1169 = vrot.lane.b32.xlu0 %v1029, 48
  %v1170 = vpop.permute.xlu0 %1169
  %1171 = vrot.lane.b32.xlu0 %v1030, 48
  %v1172 = vpop.permute.xlu0 %1171
  %1173 = vrot.lane.b32.xlu0 %v1031, 48
  %v1174 = vpop.permute.xlu0 %1173
  %1175 = vrot.lane.b32.xlu0 %v1032, 48
  %v1176 = vpop.permute.xlu0 %1175
  %1185 = vst.msk [vmem:[%s761 + $0xd] sm:$0x1] %vm190, %v1162
  %1186 = vst.msk [vmem:[%s761 + $0x1d] sm:$0x1] %vm190, %v1164
  %1187 = vst.msk [vmem:[%s761 + $0x2d] sm:$0x1] %vm190, %v1166
  %1188 = vst.msk [vmem:[%s761 + $0x3d] sm:$0x1] %vm190, %v1168
  %1189 = vst.msk [vmem:[%s761 + $0x4d] sm:$0x1] %vm190, %v1170
  %1190 = vst.msk [vmem:[%s761 + $0x5d] sm:$0x1] %vm190, %v1172
  %1191 = vst.msk [vmem:[%s761 + $0x6d] sm:$0x1] %vm190, %v1174
  %1192 = vst.msk [vmem:[%s761 + $0x7d] sm:$0x1] %vm190, %v1176
  // Predicated region
  $region14: #{time_concat_conv2d.1} parent=0 // pred_check
    _
  $region15: #{time_concat_conv2d.1} parent=0 // pred_check_branch
    %1194 = sbr.rel (0) target = $region17
  $region16: #{time_concat_conv2d.1} parent=0 // pred_region
    _
  $region17: #{time_concat_conv2d.1} parent=0 // pred_fallthru
    _
  // Predicated region
  $region18: #{time_concat_conv2d.1} parent=0 // pred_check
    _
  $region19: #{time_concat_conv2d.1} parent=0 // pred_check_branch
    %1196 = sbr.rel (0) target = $region21
  $region20: #{time_concat_conv2d.1} parent=0 // pred_region
    _
  $region21: #{time_concat_conv2d.1} parent=0 // pred_fallthru
    _

</llo_original>
